<compile_context>
chip_gen: v5e
topology: v5e:2x2
jax: 0.10.0
libtpu: 0.0.40
codegen_flags: <defaults>
</compile_context>

<pallas_src>
import numpy as np
import jax
import jax.numpy as jnp
from jax.experimental import pallas as pl
from jax.experimental.pallas import tpu as pltpu


def _mhsa_kernel(x_ref, wproj_ref, bproj_ref, qpc_ref, out_ref):
    """Per-step blocks:
       x_ref    : (bb, C, N)  activations (unmodified)
       wproj_ref: (R, C)      fused projection weight rows [Wk ; I_C ; 0 ; pad ; Wq ; Wv]
       bproj_ref: (R, 1)      matching bias column [bk ; 0 ; 1 ; pad ; bq ; bv]
                              (the `1` row makes the projection emit a ones row,
                               which carries cvec inside the energy contraction)
       qpc_ref  : (C+1, N)    [P^T ; cvec] with P^T = Wq^T @ pos, cvec = bq @ pos
       out_ref  : (bb, C, N)
    """
    bb, C, N = out_ref.shape
    a_rows = 2 * C + 1                       # rows of [k ; x ; 1]
    q_start = wproj_ref.shape[0] - 2 * C     # sublane-aligned start of the q rows

    w = wproj_ref[...]
    bcol = bproj_ref[...]
    qpc = qpc_ref[...]

    for b in range(bb):                      # bb is static (1 or B); fully unrolled
        # One MXU matmul emits [k ; x ; 1 ; pad ; q ; v] (biases via lane-broadcast add).
        proj = jnp.dot(w, x_ref[b], preferred_element_type=jnp.float32) + bcol

        a_op = proj[0:a_rows, :]                         # [k ; x ; 1]      (2C+1, N)
        q = proj[q_start:q_start + C, :]                 # (C, N)
        v = proj[q_start + C:q_start + 2 * C, :]         # (C, N)

        # energy^T[j, i] = sum_c k[c,j] q[c,i] + sum_c x[c,j] P^T[c,i] + cvec[i]
        b_op = jnp.concatenate([q, qpc], axis=0)         # [q ; P^T ; cvec] (2C+1, N)
        energy_t = jax.lax.dot_general(
            a_op.astype(jnp.bfloat16), b_op.astype(jnp.bfloat16),
            (((0,), (0,)), ((), ())),
            preferred_element_type=jnp.float32)           # (N, N), key-major

        # Softmax over the key axis (= sublane axis of the transposed energy),
        # kept in f32.  Normalization is applied AFTER the PV matmul so it only
        # touches (C, N) instead of (N, N).
        m = jnp.max(energy_t, axis=0, keepdims=True)      # (1, N)
        e = jnp.exp(energy_t - m)                         # (N, N) f32
        s = jnp.sum(e, axis=0, keepdims=True)             # (1, N)

        pv = jnp.dot(v.astype(jnp.bfloat16), e.astype(jnp.bfloat16),
                     preferred_element_type=jnp.float32)   # (C, N), lane-dense
        out_ref[b] = (pv * pl.reciprocal(s, approx=True)).astype(out_ref.dtype)


def _multi_tensorcore_chip():
    """True for chips that expose >1 TensorCore behind one JAX device
    (v7x dual-TC, v4/v5p megacore): there grid=(B,) + "parallel" shards the
    batch across cores.  Single-TC parts (v5e, v6e) return False and the
    batch is folded into a single grid step instead (correct everywhere)."""
    try:
        kind = jax.devices()[0].device_kind.lower()
    except Exception:
        return False
    return any(tag in kind for tag in ("v7", "7x", "v4", "v5p"))


def mhsa_forward(x, params):
    """x: (B, C, W, H) float32 -> (B, C, W, H)."""
    B, C, W, H = x.shape
    N = W * H
    x_flat = x.reshape(B, C, N)

    wq, wk, wv = params["wq"], params["wk"], params["wv"]
    bq, bk, bv = params["bq"], params["bk"], params["bv"]
    dt = x.dtype

    # Fused projection weight / bias column.  Row layout (qs = 2C+1 rounded up
    # to a multiple of 8 so the q/v slices start sublane-aligned):
    #   [   0 :   C] = Wk      bias bk   -> k
    #   [   C :  2C] = I_C     bias 0    -> x   (copied through the MXU)
    #   [        2C] = 0       bias 1    -> ones row (carries cvec)
    #   [2C+1 :  qs] = 0 padding
    #   [  qs : qs+C]   = Wq   bias bq   -> q
    #   [qs+C : qs+2C]  = Wv   bias bv   -> v
    a_rows = 2 * C + 1
    qs = -(-a_rows // 8) * 8
    R = qs + 2 * C

    w_proj = jnp.zeros((R, C), dt)
    w_proj = w_proj.at[0:C].set(wk)
    w_proj = w_proj.at[C:2 * C].set(jnp.eye(C, dtype=dt))
    w_proj = w_proj.at[qs:qs + C].set(wq)
    w_proj = w_proj.at[qs + C:qs + 2 * C].set(wv)

    b_proj = jnp.zeros((R, 1), dt)
    b_proj = b_proj.at[0:C, 0].set(bk)
    b_proj = b_proj.at[2 * C, 0].set(1.0)
    b_proj = b_proj.at[qs:qs + C, 0].set(bq)
    b_proj = b_proj.at[qs + C:qs + 2 * C, 0].set(bv)

    # Batch-independent relative-position constants (hoisted out of the kernel):
    #   cp[i, j] = sum_c pos[i, c] q[c, j] = sum_c x[c, j] P^T[c, i] + cvec[i]
    hp = jax.lax.Precision.HIGHEST
    pos_cn = (params["rel_h"] + params["rel_w"]).reshape(C, N)        # (C, N)
    p_t = jnp.matmul(wq.T, pos_cn, precision=hp)                      # (C, N)
    cvec = jnp.matmul(bq[None, :], pos_cn, precision=hp)              # (1, N)
    qpc = jnp.concatenate([p_t, cvec], axis=0)                        # (C+1, N)

    # Generation-aware batch handling.
    bb = 1 if (_multi_tensorcore_chip() and B > 1) else B
    nb = B // bb

    rep = lambda i: (0, 0)   # parameter blocks are shared across the grid

    cost = pl.CostEstimate(
        flops=B * (2 * R * C * N + 2 * a_rows * N * N + 2 * C * N * N),
        transcendentals=B * N * N,
        bytes_accessed=4 * (2 * B * C * N + R * C + R + (C + 1) * N),
    )

    out = pl.pallas_call(
        _mhsa_kernel,
        out_shape=jax.ShapeDtypeStruct((B, C, N), x.dtype),
        grid_spec=pltpu.PrefetchScalarGridSpec(
            num_scalar_prefetch=0,
            grid=(nb,),
            in_specs=[
                pl.BlockSpec((bb, C, N), lambda i: (i, 0, 0)),    # x
                pl.BlockSpec((R, C), rep),                        # fused W
                pl.BlockSpec((R, 1), rep),                        # fused bias column
                pl.BlockSpec((C + 1, N), rep),                    # [P^T ; cvec]
            ],
            out_specs=pl.BlockSpec((bb, C, N), lambda i: (i, 0, 0)),
        ),
        compiler_params=pltpu.CompilerParams(
            dimension_semantics=("parallel",)),
        cost_estimate=cost,
    )(x_flat, w_proj, b_proj, qpc)

    return out.reshape(B, C, W, H)


def mhsa_reference(x, params):
    """Pure-JAX reference matching the PyTorch forward exactly (f32)."""
    B, C, W, H = x.shape
    N = W * H
    hp = jax.lax.Precision.HIGHEST
    xf = x.reshape(B, C, N)
    q = jnp.einsum("oc,bcn->bon", params["wq"], xf, precision=hp) + params["bq"][None, :, None]
    k = jnp.einsum("oc,bcn->bon", params["wk"], xf, precision=hp) + params["bk"][None, :, None]
    v = jnp.einsum("oc,bcn->bon", params["wv"], xf, precision=hp) + params["bv"][None, :, None]
    cc = jnp.einsum("bcn,bcm->bnm", q, k, precision=hp)
    pos = (params["rel_h"] + params["rel_w"]).reshape(C, N).T          # (N, C)
    cp = jnp.einsum("nc,bcm->bnm", pos, q, precision=hp)
    attn = jax.nn.softmax(cc + cp, axis=-1)
    out = jnp.einsum("bcj,bij->bci", v, attn, precision=hp)
    return out.reshape(B, C, W, H)


if __name__ == "__main__":
    B, C, W, H = 2, 8, 16, 16  # n_dims=8, width=height=16
    key = jax.random.PRNGKey(0)
    ks = jax.random.split(key, 9)

    x = jax.random.normal(ks[0], (B, C, W, H), jnp.float32)
    params = {
        # 1x1 conv weights (out_ch, in_ch) and biases, deterministic init.
        "wq": 0.1 * jax.random.normal(ks[1], (C, C), jnp.float32),
        "bq": 0.1 * jax.random.normal(ks[2], (C,), jnp.float32),
        "wk": 0.1 * jax.random.normal(ks[3], (C, C), jnp.float32),
        "bk": 0.1 * jax.random.normal(ks[4], (C,), jnp.float32),
        "wv": 0.1 * jax.random.normal(ks[5], (C, C), jnp.float32),
        "bv": 0.1 * jax.random.normal(ks[6], (C,), jnp.float32),
        # relative position parameters, same shapes as nn.Parameter(randn(...))
        "rel_h": jax.random.normal(ks[7], (1, C, 1, H), jnp.float32),
        "rel_w": jax.random.normal(ks[8], (1, C, W, 1), jnp.float32),
    }

    fwd = jax.jit(mhsa_forward)
    out = jax.block_until_ready(fwd(x, params))

    ref = mhsa_reference(x, params)
    np.testing.assert_allclose(np.asarray(out), np.asarray(ref),
                               rtol=1e-2, atol=1e-2)
    print("KERNEL_OK")
</pallas_src>

<mosaic_0001>
module attributes {stable_mosaic.version = 11 : i64} {
  func.func @_mhsa_kernel(%arg0: i32, %arg1: memref<2x8x256xf32, #tpu.memory_space<vmem>>, %arg2: memref<40x8xf32, #tpu.memory_space<vmem>>, %arg3: memref<40x1xf32, #tpu.memory_space<vmem>>, %arg4: memref<9x256xf32, #tpu.memory_space<vmem>>, %arg5: memref<2x8x256xf32, #tpu.memory_space<vmem>>) attributes {dimension_semantics = [#tpu.dimension_semantics<parallel>], iteration_bounds = array<i64: 1>, scalar_prefetch = 0 : i64, scratch_operands = 0 : i64, tpu.core_type = #tpu.core_type<tc>, window_params = [{transform_indices = @transform_0, window_bounds = array<i64: 2, 8, 256>}, {pipeline_mode = #tpu.pipeline_mode<synchronous>, transform_indices = @transform_1, window_bounds = array<i64: 40, 8>}, {pipeline_mode = #tpu.pipeline_mode<synchronous>, transform_indices = @transform_2, window_bounds = array<i64: 40, 1>}, {pipeline_mode = #tpu.pipeline_mode<synchronous>, transform_indices = @transform_3, window_bounds = array<i64: 9, 256>}, {transform_indices = @transform_4, window_bounds = array<i64: 2, 8, 256>}]} {
    %c0 = arith.constant 0 : index
    %c0_0 = arith.constant 0 : index
    %0 = vector.load %arg2[%c0, %c0_0] : memref<40x8xf32, #tpu.memory_space<vmem>>, vector<40x8xf32>
    %c0_1 = arith.constant 0 : index
    %c0_2 = arith.constant 0 : index
    %1 = vector.load %arg3[%c0_1, %c0_2] : memref<40x1xf32, #tpu.memory_space<vmem>>, vector<40x1xf32>
    %c0_3 = arith.constant 0 : index
    %c0_4 = arith.constant 0 : index
    %2 = vector.load %arg4[%c0_3, %c0_4] : memref<9x256xf32, #tpu.memory_space<vmem>>, vector<9x256xf32>
    %c0_5 = arith.constant 0 : index
    %c0_6 = arith.constant 0 : index
    %c0_7 = arith.constant 0 : index
    %3 = vector.load %arg1[%c0_5, %c0_6, %c0_7] : memref<2x8x256xf32, #tpu.memory_space<vmem>>, vector<1x8x256xf32>
    %4 = vector.shape_cast %3 : vector<1x8x256xf32> to vector<8x256xf32>
    %cst = arith.constant dense<0.000000e+00> : vector<40x256xf32>
    %5 = tpu.matmul %0, %4, %cst {dimension_numbers = #tpu.dot_dimension_numbers<[1], [0], [0], [1], [0, 0, 1, 1], [], []>} : vector<40x8xf32>, vector<8x256xf32>, vector<40x256xf32> -> vector<40x256xf32>
    %6 = vector.broadcast %1 : vector<40x1xf32> to vector<40x256xf32>
    %7 = arith.addf %5, %6 : vector<40x256xf32>
    %8 = vector.extract_strided_slice %7 {offsets = [0, 0], sizes = [17, 256], strides = [1, 1]} : vector<40x256xf32> to vector<17x256xf32>
    %9 = vector.extract_strided_slice %7 {offsets = [24, 0], sizes = [8, 256], strides = [1, 1]} : vector<40x256xf32> to vector<8x256xf32>
    %10 = vector.extract_strided_slice %7 {offsets = [32, 0], sizes = [8, 256], strides = [1, 1]} : vector<40x256xf32> to vector<8x256xf32>
    %11 = tpu.concatenate %9, %2 in 0 : vector<8x256xf32>, vector<9x256xf32> -> vector<17x256xf32>
    %12 = arith.truncf %8 : vector<17x256xf32> to vector<17x256xbf16>
    %13 = arith.truncf %11 : vector<17x256xf32> to vector<17x256xbf16>
    %cst_8 = arith.constant dense<0.000000e+00> : vector<256x256xf32>
    %14 = tpu.matmul %12, %13, %cst_8 {dimension_numbers = #tpu.dot_dimension_numbers<[0], [0], [1], [1], [0, 1, 1, 1], [], []>} : vector<17x256xbf16>, vector<17x256xbf16>, vector<256x256xf32> -> vector<256x256xf32>
    %cst_9 = arith.constant dense<0xFF800000> : vector<256xf32>
    %15 = vector.multi_reduction <maximumf>, %14, %cst_9 [0] : vector<256x256xf32> to vector<256xf32>
    %16 = vector.shape_cast %15 : vector<256xf32> to vector<1x256xf32>
    %17 = vector.broadcast %16 : vector<1x256xf32> to vector<256x256xf32>
    %18 = arith.subf %14, %17 : vector<256x256xf32>
    %19 = math.exp %18 : vector<256x256xf32>
    %cst_10 = arith.constant dense<0.000000e+00> : vector<256xf32>
    %20 = vector.multi_reduction <add>, %19, %cst_10 [0] : vector<256x256xf32> to vector<256xf32>
    %21 = vector.shape_cast %20 : vector<256xf32> to vector<1x256xf32>
    %22 = arith.truncf %10 : vector<8x256xf32> to vector<8x256xbf16>
    %23 = arith.truncf %19 : vector<256x256xf32> to vector<256x256xbf16>
    %cst_11 = arith.constant dense<0.000000e+00> : vector<8x256xf32>
    %24 = tpu.matmul %22, %23, %cst_11 {dimension_numbers = #tpu.dot_dimension_numbers<[1], [0], [0], [1], [0, 0, 1, 1], [], []>} : vector<8x256xbf16>, vector<256x256xbf16>, vector<8x256xf32> -> vector<8x256xf32>
    %25 = tpu.reciprocal %21 {approx = true} : vector<1x256xf32> -> vector<1x256xf32>
    %26 = vector.broadcast %25 : vector<1x256xf32> to vector<8x256xf32>
    %27 = arith.mulf %24, %26 : vector<8x256xf32>
    %c0_12 = arith.constant 0 : index
    %c0_13 = arith.constant 0 : index
    %c0_14 = arith.constant 0 : index
    %28 = vector.load %arg5[%c0_12, %c0_13, %c0_14] : memref<2x8x256xf32, #tpu.memory_space<vmem>>, vector<1x8x256xf32>
    %29 = vector.shape_cast %28 : vector<1x8x256xf32> to vector<8x256xf32>
    %30 = vector.shape_cast %27 : vector<8x256xf32> to vector<1x8x256xf32>
    tpu.vector_store %arg5[%c0_12, %c0_13, %c0_14], %30 {strides = array<i32>} : memref<2x8x256xf32, #tpu.memory_space<vmem>>, vector<1x8x256xf32>,
    %c1 = arith.constant 1 : index
    %c0_15 = arith.constant 0 : index
    %c0_16 = arith.constant 0 : index
    %31 = vector.load %arg1[%c1, %c0_15, %c0_16] : memref<2x8x256xf32, #tpu.memory_space<vmem>>, vector<1x8x256xf32>
    %32 = vector.shape_cast %31 : vector<1x8x256xf32> to vector<8x256xf32>
    %cst_17 = arith.constant dense<0.000000e+00> : vector<40x256xf32>
    %33 = tpu.matmul %0, %32, %cst_17 {dimension_numbers = #tpu.dot_dimension_numbers<[1], [0], [0], [1], [0, 0, 1, 1], [], []>} : vector<40x8xf32>, vector<8x256xf32>, vector<40x256xf32> -> vector<40x256xf32>
    %34 = vector.broadcast %1 : vector<40x1xf32> to vector<40x256xf32>
    %35 = arith.addf %33, %34 : vector<40x256xf32>
    %36 = vector.extract_strided_slice %35 {offsets = [0, 0], sizes = [17, 256], strides = [1, 1]} : vector<40x256xf32> to vector<17x256xf32>
    %37 = vector.extract_strided_slice %35 {offsets = [24, 0], sizes = [8, 256], strides = [1, 1]} : vector<40x256xf32> to vector<8x256xf32>
    %38 = vector.extract_strided_slice %35 {offsets = [32, 0], sizes = [8, 256], strides = [1, 1]} : vector<40x256xf32> to vector<8x256xf32>
    %39 = tpu.concatenate %37, %2 in 0 : vector<8x256xf32>, vector<9x256xf32> -> vector<17x256xf32>
    %40 = arith.truncf %36 : vector<17x256xf32> to vector<17x256xbf16>
    %41 = arith.truncf %39 : vector<17x256xf32> to vector<17x256xbf16>
    %cst_18 = arith.constant dense<0.000000e+00> : vector<256x256xf32>
    %42 = tpu.matmul %40, %41, %cst_18 {dimension_numbers = #tpu.dot_dimension_numbers<[0], [0], [1], [1], [0, 1, 1, 1], [], []>} : vector<17x256xbf16>, vector<17x256xbf16>, vector<256x256xf32> -> vector<256x256xf32>
    %cst_19 = arith.constant dense<0xFF800000> : vector<256xf32>
    %43 = vector.multi_reduction <maximumf>, %42, %cst_19 [0] : vector<256x256xf32> to vector<256xf32>
    %44 = vector.shape_cast %43 : vector<256xf32> to vector<1x256xf32>
    %45 = vector.broadcast %44 : vector<1x256xf32> to vector<256x256xf32>
    %46 = arith.subf %42, %45 : vector<256x256xf32>
    %47 = math.exp %46 : vector<256x256xf32>
    %cst_20 = arith.constant dense<0.000000e+00> : vector<256xf32>
    %48 = vector.multi_reduction <add>, %47, %cst_20 [0] : vector<256x256xf32> to vector<256xf32>
    %49 = vector.shape_cast %48 : vector<256xf32> to vector<1x256xf32>
    %50 = arith.truncf %38 : vector<8x256xf32> to vector<8x256xbf16>
    %51 = arith.truncf %47 : vector<256x256xf32> to vector<256x256xbf16>
    %cst_21 = arith.constant dense<0.000000e+00> : vector<8x256xf32>
    %52 = tpu.matmul %50, %51, %cst_21 {dimension_numbers = #tpu.dot_dimension_numbers<[1], [0], [0], [1], [0, 0, 1, 1], [], []>} : vector<8x256xbf16>, vector<256x256xbf16>, vector<8x256xf32> -> vector<8x256xf32>
    %53 = tpu.reciprocal %49 {approx = true} : vector<1x256xf32> -> vector<1x256xf32>
    %54 = vector.broadcast %53 : vector<1x256xf32> to vector<8x256xf32>
    %55 = arith.mulf %52, %54 : vector<8x256xf32>
    %c1_22 = arith.constant 1 : index
    %c0_23 = arith.constant 0 : index
    %c0_24 = arith.constant 0 : index
    %56 = vector.load %arg5[%c1_22, %c0_23, %c0_24] : memref<2x8x256xf32, #tpu.memory_space<vmem>>, vector<1x8x256xf32>
    %57 = vector.shape_cast %56 : vector<1x8x256xf32> to vector<8x256xf32>
    %58 = vector.shape_cast %55 : vector<8x256xf32> to vector<1x8x256xf32>
    tpu.vector_store %arg5[%c1_22, %c0_23, %c0_24], %58 {strides = array<i32>} : memref<2x8x256xf32, #tpu.memory_space<vmem>>, vector<1x8x256xf32>,
    return
  }
  func.func @transform_0(%arg0: i32) -> (i32, i32, i32) {
    %c0_i32 = arith.constant 0 : i32
    %c0_i32_0 = arith.constant 0 : i32
    %c0_i32_1 = arith.constant 0 : i32
    return %arg0, %c0_i32, %c0_i32_0 : i32, i32, i32
  }
  func.func @transform_1(%arg0: i32) -> (i32, i32) {
    %c0_i32 = arith.constant 0 : i32
    %c0_i32_0 = arith.constant 0 : i32
    %c0_i32_1 = arith.constant 0 : i32
    return %c0_i32, %c0_i32_0 : i32, i32
  }
  func.func @transform_2(%arg0: i32) -> (i32, i32) {
    %c0_i32 = arith.constant 0 : i32
    %c0_i32_0 = arith.constant 0 : i32
    %c0_i32_1 = arith.constant 0 : i32
    return %c0_i32, %c0_i32_0 : i32, i32
  }
  func.func @transform_3(%arg0: i32) -> (i32, i32) {
    %c0_i32 = arith.constant 0 : i32
    %c0_i32_0 = arith.constant 0 : i32
    %c0_i32_1 = arith.constant 0 : i32
    return %c0_i32, %c0_i32_0 : i32, i32
  }
  func.func @transform_4(%arg0: i32) -> (i32, i32, i32) {
    %c0_i32 = arith.constant 0 : i32
    %c0_i32_0 = arith.constant 0 : i32
    %c0_i32_1 = arith.constant 0 : i32
    return %arg0, %c0_i32, %c0_i32_0 : i32, i32, i32
  }
}

</mosaic_0001>

<llo_original>
// kernel: mhsa_forward.1
$region0: #{mhsa_forward.1}
  #allocation0 [shape = 'u32[]', space=smem, size = 0x4, offset = 0x4, fixed_abs, tag = 'smem constant byte address 0x4 - core index']
  #allocation1 [shape = 'u32[72,128]{1,0:T(1,128)}', space=vmem, size = 0x9000, scoped, tag = 'internal scratch']
  %s0 = inlined_call_operand.vmem [shape: f32[2,8,256], index: 0, kind: input, shape index: {}]
  %s1 = inlined_call_operand.vmem [shape: f32[40,8], index: 1, kind: input, shape index: {}]
  %s2 = inlined_call_operand.vmem [shape: f32[40,1], index: 2, kind: input, shape index: {}]
  %s3 = inlined_call_operand.vmem [shape: f32[9,256], index: 3, kind: input, shape index: {}]
  %s4 = inlined_call_operand.vmem [shape: f32[2,8,256], index: 4, kind: output, shape index: {}]
  %s5 = sld [smem:[#allocation0]]
  $region26: #{mhsa_forward.1} parent=0
    _
  %s7 = ssub.s32 1, %s5
  %s8 = scalar_select 0, %s7, %s5
  // Predicated region
  $region2: #{mhsa_forward.1} parent=0 // pred_check
    _
  $region3: #{mhsa_forward.1} parent=0 // pred_check_branch
    %10 = sbr.rel (0) target = $region5
  $region4: #{mhsa_forward.1} parent=0 // pred_region
    _
  $region5: #{mhsa_forward.1} parent=0 // pred_fallthru
    _
  // Predicated region
  $region6: #{mhsa_forward.1} parent=0 // pred_check
    _
  $region7: #{mhsa_forward.1} parent=0 // pred_check_branch
    %12 = sbr.rel (0) target = $region9
  $region8: #{mhsa_forward.1} parent=0 // pred_region
    _
  $region9: #{mhsa_forward.1} parent=0 // pred_fallthru
    _
  // Predicated region
  $region10: #{mhsa_forward.1} parent=0 // pred_check
    _
  $region11: #{mhsa_forward.1} parent=0 // pred_check_branch
    %14 = sbr.rel (0) target = $region13
  $region12: #{mhsa_forward.1} parent=0 // pred_region
    _
  $region13: #{mhsa_forward.1} parent=0 // pred_fallthru
    _
  // Predicated region
  $region14: #{mhsa_forward.1} parent=0 // pred_check
    _
  $region15: #{mhsa_forward.1} parent=0 // pred_check_branch
    %16 = sbr.rel (0) target = $region17
  $region16: #{mhsa_forward.1} parent=0 // pred_region
    _
  $region17: #{mhsa_forward.1} parent=0 // pred_fallthru
    _
  %v18 = vld [vmem:[%s1] sm:$0xff]
  %v19 = vld [vmem:[%s1 + $0x8] sm:$0xff]
  %v20 = vld [vmem:[%s1 + $0x10] sm:$0xff]
  %v21 = vld [vmem:[%s1 + $0x18] sm:$0xff]
  %v22 = vld [vmem:[%s1 + $0x20] sm:$0xff]
  %v23 = vld [vmem:[%s2] sm:$0xff]
  %v24 = vld [vmem:[%s2 + $0x8] sm:$0xff]
  %v25 = vld [vmem:[%s2 + $0x10] sm:$0xff]
  %v26 = vld [vmem:[%s2 + $0x18] sm:$0xff]
  %v27 = vld [vmem:[%s2 + $0x20] sm:$0xff]
  %v28 = vld [vmem:[%s3] sm:$0xff]
  %v29 = vld [vmem:[%s3 + $0x8] sm:$0xff]
  %v30 = vld [vmem:[%s3 + $0x10] sm:$0x1]
  %v31 = vld [vmem:[%s3 + $0x18] sm:$0x1]
  %v32 = vld [vmem:[%s0] sm:$0xff]
  %v33 = vld [vmem:[%s0 + $0x8] sm:$0xff]
  %35 = vset.pattern.permute.xlu0 0
  %36 = vperm.xlu0 %35, %v23
  %v37 = vpop.permute.xlu0 %36
  %40 = vset.pattern.permute.xlu0 0
  %41 = vperm.xlu0 %40, %v24
  %v42 = vpop.permute.xlu0 %41
  %45 = vset.pattern.permute.xlu0 0
  %46 = vperm.xlu0 %45, %v25
  %v47 = vpop.permute.xlu0 %46
  %50 = vset.pattern.permute.xlu0 0
  %51 = vperm.xlu0 %50, %v26
  %v52 = vpop.permute.xlu0 %51
  %55 = vset.pattern.permute.xlu0 0
  %56 = vperm.xlu0 %55, %v27
  %v57 = vpop.permute.xlu0 %56
  %vm59 = vcmask 64512
  %v61 = vsel %vm59, %v18, 0
  %v64 = vsel %vm59, %v19, 0
  %v67 = vsel %vm59, %v20, 0
  %v70 = vsel %vm59, %v21, 0
  %v73 = vsel %vm59, %v22, 0
  %75 = vmatpush.msra.mxu0 0.0
  %76 = vmatpush.msra.mxu0 0.0
  %77 = vmatpush.msra.mxu0 0.0
  %78 = vmatpush.msra.mxu0 0.0
  %79 = vmatpush.msra.mxu0 0.0
  %80 = vmatpush.msra.mxu0 0.0
  %81 = vmatpush.msra.mxu0 0.0
  %82 = vmatpush.msra.mxu0 0.0
  %83 = vmatpush.msra.mxu0 0.0
  %84 = vmatpush.msra.mxu0 0.0
  %85 = vmatpush.msra.mxu0 0.0
  %86 = vmatpush.msra.mxu0 0.0
  %87 = vmatpush.msra.mxu0 0.0
  %88 = vmatpush.msra.mxu0 0.0
  %89 = vmatpush.msra.mxu0 0.0
  %90 = vmatpush.msra.mxu0 %v32
  %91 = vmatmul.f32.gmra.mxu0 %v61
  %v92 = vpop.f32.mrf.mxu0
  %v93 = vadd.f32 %v37, %v92
  %94 = vmatmul.f32.gmra.mxu0 %v64
  %v95 = vpop.f32.mrf.mxu0
  %v96 = vadd.f32 %v42, %v95
  %97 = vmatmul.f32.gmra.mxu0 %v67
  %v98 = vpop.f32.mrf.mxu0
  %v99 = vadd.f32 %v47, %v98
  %100 = vmatmul.f32.gmra.mxu0 %v70
  %v101 = vpop.f32.mrf.mxu0
  %v102 = vadd.f32 %v52, %v101
  %103 = vmatmul.f32.gmra.mxu0 %v73
  %v104 = vpop.f32.mrf.mxu0
  %v105 = vadd.f32 %v57, %v104
  %106 = vdwg.mxu0
  %107 = vmatpush.msra.mxu0 0.0
  %108 = vmatpush.msra.mxu0 0.0
  %109 = vmatpush.msra.mxu0 0.0
  %110 = vmatpush.msra.mxu0 0.0
  %111 = vmatpush.msra.mxu0 0.0
  %112 = vmatpush.msra.mxu0 0.0
  %113 = vmatpush.msra.mxu0 0.0
  %114 = vmatpush.msra.mxu0 0.0
  %115 = vmatpush.msra.mxu0 0.0
  %116 = vmatpush.msra.mxu0 0.0
  %117 = vmatpush.msra.mxu0 0.0
  %118 = vmatpush.msra.mxu0 0.0
  %119 = vmatpush.msra.mxu0 0.0
  %120 = vmatpush.msra.mxu0 0.0
  %121 = vmatpush.msra.mxu0 0.0
  %122 = vmatpush.msra.mxu0 %v33
  %123 = vmatmul.f32.gmra.mxu0 %v61
  %v124 = vpop.f32.mrf.mxu0
  %v125 = vadd.f32 %v37, %v124
  %126 = vmatmul.f32.gmra.mxu0 %v64
  %v127 = vpop.f32.mrf.mxu0
  %v128 = vadd.f32 %v42, %v127
  %129 = vmatmul.f32.gmra.mxu0 %v67
  %v130 = vpop.f32.mrf.mxu0
  %v131 = vadd.f32 %v47, %v130
  %132 = vmatmul.f32.gmra.mxu0 %v70
  %v133 = vpop.f32.mrf.mxu0
  %v134 = vadd.f32 %v52, %v133
  %135 = vmatmul.f32.gmra.mxu0 %v73
  %v136 = vpop.f32.mrf.mxu0
  %v137 = vadd.f32 %v57, %v136
  %138 = vdwg.mxu0
  %v139 = vpack.c.bf16 %v96, %v93
  %v140 = vpack.c.bf16 %v128, %v125
  %v141 = vpack.c.bf16 %v99, %v99
  %v142 = vpack.c.bf16 %v131, %v131
  %v143 = vpack.c.bf16 %v28, %v102
  %v144 = vpack.c.bf16 %v29, %v134
  %v145 = vpack.c.bf16 %v30, %v30
  %v146 = vpack.c.bf16 %v31, %v31
  %147 = vxpose.binary.xlu0.c.b16.start [1/16] %v140, %v139, 128
  %148 = vxpose.binary.xlu0.c.b16.cont [2/16] %v142, %v141, 128
  %149 = vxpose.binary.xlu0.c.b16.cont [3/16] 0, 0, 128
  %150 = vxpose.binary.xlu0.c.b16.cont [4/16] 0, 0, 128
  %151 = vxpose.binary.xlu0.c.b16.cont [5/16] 0, 0, 128
  %152 = vxpose.binary.xlu0.c.b16.cont [6/16] 0, 0, 128
  %153 = vxpose.binary.xlu0.c.b16.cont [7/16] 0, 0, 128
  %154 = vxpose.binary.xlu0.c.b16.end [8/16] 0, 0, 128
  %v155 = vpop.trf.xlu0
  %v156 = vpop.trf.xlu0
  %v157 = vpop.trf.xlu0
  %v158 = vpop.trf.xlu0
  %v159 = vpop.trf.xlu0
  %v160 = vpop.trf.xlu0
  %v161 = vpop.trf.xlu0
  %v162 = vpop.trf.xlu0
  %v163 = vpop.trf.xlu0
  %v164 = vpop.trf.xlu0
  %v165 = vpop.trf.xlu0
  %v166 = vpop.trf.xlu0
  %v167 = vpop.trf.xlu0
  %v168 = vpop.trf.xlu0
  %v169 = vpop.trf.xlu0
  %v170 = vpop.trf.xlu0
  %vm171 = vcmask 138240
  %v173 = vsel %vm171, %v155, 0
  %v176 = vsel %vm171, %v157, 0
  %v179 = vsel %vm171, %v159, 0
  %v182 = vsel %vm171, %v161, 0
  %v185 = vsel %vm171, %v163, 0
  %v188 = vsel %vm171, %v165, 0
  %v191 = vsel %vm171, %v167, 0
  %v194 = vsel %vm171, %v169, 0
  %v197 = vsel %vm171, %v156, 0
  %v200 = vsel %vm171, %v158, 0
  %v203 = vsel %vm171, %v160, 0
  %v206 = vsel %vm171, %v162, 0
  %v209 = vsel %vm171, %v164, 0
  %v212 = vsel %vm171, %v166, 0
  %v215 = vsel %vm171, %v168, 0
  %v218 = vsel %vm171, %v170, 0
  %vm220 = vcmask 1040384
  %v221 = vsel 0, 4294967295, 65535
  %v222 = vsel %vm220, %v221, 0
  %v224 = vand.u32 %v145, %v222
  %v227 = vand.u32 %v146, %v222
  %229 = vmatpush.bf16.msra.mxu0 0
  %230 = vmatpush.bf16.msra.mxu0 0
  %231 = vmatpush.bf16.msra.mxu0 0
  %232 = vmatpush.bf16.msra.mxu0 0
  %233 = vmatpush.bf16.msra.mxu0 0
  %234 = vmatpush.bf16.msra.mxu0 0
  %235 = vmatpush.bf16.msra.mxu0 %v224
  %236 = vmatpush.bf16.msra.mxu0 %v143
  %237 = vmatmul.bf16.gmra.mxu0 %v173
  %v238 = vpop.f32.mrf.mxu0
  %v239 = vadd.f32 0.0, %v238
  %v240 = vpop.f32.mrf.mxu0
  %v241 = vadd.f32 0.0, %v240
  %242 = vmatmul.bf16.gmra.mxu0 %v176
  %v243 = vpop.f32.mrf.mxu0
  %v244 = vadd.f32 0.0, %v243
  %v245 = vpop.f32.mrf.mxu0
  %v246 = vadd.f32 0.0, %v245
  %247 = vmatmul.bf16.gmra.mxu0 %v179
  %v248 = vpop.f32.mrf.mxu0
  %v249 = vadd.f32 0.0, %v248
  %v250 = vpop.f32.mrf.mxu0
  %v251 = vadd.f32 0.0, %v250
  %252 = vmatmul.bf16.gmra.mxu0 %v182
  %v253 = vpop.f32.mrf.mxu0
  %v254 = vadd.f32 0.0, %v253
  %v255 = vpop.f32.mrf.mxu0
  %v256 = vadd.f32 0.0, %v255
  %257 = vmatmul.bf16.gmra.mxu0 %v185
  %v258 = vpop.f32.mrf.mxu0
  %v259 = vadd.f32 0.0, %v258
  %v260 = vpop.f32.mrf.mxu0
  %v261 = vadd.f32 0.0, %v260
  %262 = vmatmul.bf16.gmra.mxu0 %v188
  %v263 = vpop.f32.mrf.mxu0
  %v264 = vadd.f32 0.0, %v263
  %v265 = vpop.f32.mrf.mxu0
  %v266 = vadd.f32 0.0, %v265
  %267 = vmatmul.bf16.gmra.mxu0 %v191
  %v268 = vpop.f32.mrf.mxu0
  %v269 = vadd.f32 0.0, %v268
  %v270 = vpop.f32.mrf.mxu0
  %v271 = vadd.f32 0.0, %v270
  %272 = vmatmul.bf16.gmra.mxu0 %v194
  %v273 = vpop.f32.mrf.mxu0
  %v274 = vadd.f32 0.0, %v273
  %v275 = vpop.f32.mrf.mxu0
  %v276 = vadd.f32 0.0, %v275
  %277 = vmatmul.bf16.gmra.mxu0 %v197
  %v278 = vpop.f32.mrf.mxu0
  %v279 = vadd.f32 0.0, %v278
  %v280 = vpop.f32.mrf.mxu0
  %v281 = vadd.f32 0.0, %v280
  %282 = vmatmul.bf16.gmra.mxu0 %v200
  %v283 = vpop.f32.mrf.mxu0
  %v284 = vadd.f32 0.0, %v283
  %v285 = vpop.f32.mrf.mxu0
  %v286 = vadd.f32 0.0, %v285
  %287 = vmatmul.bf16.gmra.mxu0 %v203
  %v288 = vpop.f32.mrf.mxu0
  %v289 = vadd.f32 0.0, %v288
  %v290 = vpop.f32.mrf.mxu0
  %v291 = vadd.f32 0.0, %v290
  %292 = vmatmul.bf16.gmra.mxu0 %v206
  %v293 = vpop.f32.mrf.mxu0
  %v294 = vadd.f32 0.0, %v293
  %v295 = vpop.f32.mrf.mxu0
  %v296 = vadd.f32 0.0, %v295
  %297 = vmatmul.bf16.gmra.mxu0 %v209
  %v298 = vpop.f32.mrf.mxu0
  %v299 = vadd.f32 0.0, %v298
  %v300 = vpop.f32.mrf.mxu0
  %v301 = vadd.f32 0.0, %v300
  %302 = vmatmul.bf16.gmra.mxu0 %v212
  %v303 = vpop.f32.mrf.mxu0
  %v304 = vadd.f32 0.0, %v303
  %v305 = vpop.f32.mrf.mxu0
  %v306 = vadd.f32 0.0, %v305
  %307 = vmatmul.bf16.gmra.mxu0 %v215
  %v308 = vpop.f32.mrf.mxu0
  %v309 = vadd.f32 0.0, %v308
  %v310 = vpop.f32.mrf.mxu0
  %v311 = vadd.f32 0.0, %v310
  %312 = vmatmul.bf16.gmra.mxu0 %v218
  %v313 = vpop.f32.mrf.mxu0
  %v314 = vadd.f32 0.0, %v313
  %v315 = vpop.f32.mrf.mxu0
  %v316 = vadd.f32 0.0, %v315
  %317 = vdwg.mxu0
  %318 = vmatpush.bf16.msra.mxu0 0
  %319 = vmatpush.bf16.msra.mxu0 0
  %320 = vmatpush.bf16.msra.mxu0 0
  %321 = vmatpush.bf16.msra.mxu0 0
  %322 = vmatpush.bf16.msra.mxu0 0
  %323 = vmatpush.bf16.msra.mxu0 0
  %324 = vmatpush.bf16.msra.mxu0 %v227
  %325 = vmatpush.bf16.msra.mxu0 %v144
  %326 = vmatmul.bf16.gmra.mxu0 %v173
  %v327 = vpop.f32.mrf.mxu0
  %v328 = vadd.f32 0.0, %v327
  %v329 = vpop.f32.mrf.mxu0
  %v330 = vadd.f32 0.0, %v329
  %331 = vmatmul.bf16.gmra.mxu0 %v176
  %v332 = vpop.f32.mrf.mxu0
  %v333 = vadd.f32 0.0, %v332
  %v334 = vpop.f32.mrf.mxu0
  %v335 = vadd.f32 0.0, %v334
  %336 = vmatmul.bf16.gmra.mxu0 %v179
  %v337 = vpop.f32.mrf.mxu0
  %v338 = vadd.f32 0.0, %v337
  %v339 = vpop.f32.mrf.mxu0
  %v340 = vadd.f32 0.0, %v339
  %341 = vmatmul.bf16.gmra.mxu0 %v182
  %v342 = vpop.f32.mrf.mxu0
  %v343 = vadd.f32 0.0, %v342
  %v344 = vpop.f32.mrf.mxu0
  %v345 = vadd.f32 0.0, %v344
  %346 = vmatmul.bf16.gmra.mxu0 %v185
  %v347 = vpop.f32.mrf.mxu0
  %v348 = vadd.f32 0.0, %v347
  %v349 = vpop.f32.mrf.mxu0
  %v350 = vadd.f32 0.0, %v349
  %351 = vmatmul.bf16.gmra.mxu0 %v188
  %v352 = vpop.f32.mrf.mxu0
  %v353 = vadd.f32 0.0, %v352
  %v354 = vpop.f32.mrf.mxu0
  %v355 = vadd.f32 0.0, %v354
  %356 = vmatmul.bf16.gmra.mxu0 %v191
  %v357 = vpop.f32.mrf.mxu0
  %v358 = vadd.f32 0.0, %v357
  %v359 = vpop.f32.mrf.mxu0
  %v360 = vadd.f32 0.0, %v359
  %361 = vmatmul.bf16.gmra.mxu0 %v194
  %v362 = vpop.f32.mrf.mxu0
  %v363 = vadd.f32 0.0, %v362
  %v364 = vpop.f32.mrf.mxu0
  %v365 = vadd.f32 0.0, %v364
  %366 = vmatmul.bf16.gmra.mxu0 %v197
  %v367 = vpop.f32.mrf.mxu0
  %v368 = vadd.f32 0.0, %v367
  %v369 = vpop.f32.mrf.mxu0
  %v370 = vadd.f32 0.0, %v369
  %371 = vmatmul.bf16.gmra.mxu0 %v200
  %v372 = vpop.f32.mrf.mxu0
  %v373 = vadd.f32 0.0, %v372
  %v374 = vpop.f32.mrf.mxu0
  %v375 = vadd.f32 0.0, %v374
  %376 = vmatmul.bf16.gmra.mxu0 %v203
  %v377 = vpop.f32.mrf.mxu0
  %v378 = vadd.f32 0.0, %v377
  %v379 = vpop.f32.mrf.mxu0
  %v380 = vadd.f32 0.0, %v379
  %381 = vmatmul.bf16.gmra.mxu0 %v206
  %v382 = vpop.f32.mrf.mxu0
  %v383 = vadd.f32 0.0, %v382
  %v384 = vpop.f32.mrf.mxu0
  %v385 = vadd.f32 0.0, %v384
  %386 = vmatmul.bf16.gmra.mxu0 %v209
  %v387 = vpop.f32.mrf.mxu0
  %v388 = vadd.f32 0.0, %v387
  %v389 = vpop.f32.mrf.mxu0
  %v390 = vadd.f32 0.0, %v389
  %391 = vmatmul.bf16.gmra.mxu0 %v212
  %v392 = vpop.f32.mrf.mxu0
  %v393 = vadd.f32 0.0, %v392
  %v394 = vpop.f32.mrf.mxu0
  %v395 = vadd.f32 0.0, %v394
  %396 = vmatmul.bf16.gmra.mxu0 %v215
  %v397 = vpop.f32.mrf.mxu0
  %v398 = vadd.f32 0.0, %v397
  %v399 = vpop.f32.mrf.mxu0
  %v400 = vadd.f32 0.0, %v399
  %401 = vmatmul.bf16.gmra.mxu0 %v218
  %v402 = vpop.f32.mrf.mxu0
  %v403 = vadd.f32 0.0, %v402
  %v404 = vpop.f32.mrf.mxu0
  %v405 = vadd.f32 0.0, %v404
  %406 = vdwg.mxu0
  %v407 = vmax.f32 %v239, %v244
  %v408 = vmax.f32 %v241, %v246
  %v409 = vmax.f32 %v407, %v249
  %v410 = vmax.f32 %v408, %v251
  %v411 = vmax.f32 %v409, %v254
  %v412 = vmax.f32 %v410, %v256
  %v413 = vmax.f32 %v411, %v259
  %v414 = vmax.f32 %v412, %v261
  %v415 = vmax.f32 %v413, %v264
  %v416 = vmax.f32 %v414, %v266
  %v417 = vmax.f32 %v415, %v269
  %v418 = vmax.f32 %v416, %v271
  %v419 = vmax.f32 %v417, %v274
  %v420 = vmax.f32 %v418, %v276
  %v421 = vmax.f32 %v419, %v279
  %v422 = vmax.f32 %v420, %v281
  %v423 = vmax.f32 %v421, %v284
  %v424 = vmax.f32 %v422, %v286
  %v425 = vmax.f32 %v423, %v289
  %v426 = vmax.f32 %v424, %v291
  %v427 = vmax.f32 %v425, %v294
  %v428 = vmax.f32 %v426, %v296
  %v429 = vmax.f32 %v427, %v299
  %v430 = vmax.f32 %v428, %v301
  %v431 = vmax.f32 %v429, %v304
  %v432 = vmax.f32 %v430, %v306
  %v433 = vmax.f32 %v431, %v309
  %v434 = vmax.f32 %v432, %v311
  %v435 = vmax.f32 %v433, %v314
  %v436 = vmax.f32 %v434, %v316
  %v437 = vmax.f32 %v435, %v436
  %v438 = vrot.slane %v437, 4
  %v439 = vmax.f32 %v437, %v438
  %v440 = vrot.slane %v439, 2
  %v441 = vmax.f32 %v439, %v440
  %v442 = vrot.slane %v441, 1
  %v443 = vmax.f32 %v441, %v442
  %v444 = vmax.f32 %v328, %v333
  %v445 = vmax.f32 %v330, %v335
  %v446 = vmax.f32 %v444, %v338
  %v447 = vmax.f32 %v445, %v340
  %v448 = vmax.f32 %v446, %v343
  %v449 = vmax.f32 %v447, %v345
  %v450 = vmax.f32 %v448, %v348
  %v451 = vmax.f32 %v449, %v350
  %v452 = vmax.f32 %v450, %v353
  %v453 = vmax.f32 %v451, %v355
  %v454 = vmax.f32 %v452, %v358
  %v455 = vmax.f32 %v453, %v360
  %v456 = vmax.f32 %v454, %v363
  %v457 = vmax.f32 %v455, %v365
  %v458 = vmax.f32 %v456, %v368
  %v459 = vmax.f32 %v457, %v370
  %v460 = vmax.f32 %v458, %v373
  %v461 = vmax.f32 %v459, %v375
  %v462 = vmax.f32 %v460, %v378
  %v463 = vmax.f32 %v461, %v380
  %v464 = vmax.f32 %v462, %v383
  %v465 = vmax.f32 %v463, %v385
  %v466 = vmax.f32 %v464, %v388
  %v467 = vmax.f32 %v465, %v390
  %v468 = vmax.f32 %v466, %v393
  %v469 = vmax.f32 %v467, %v395
  %v470 = vmax.f32 %v468, %v398
  %v471 = vmax.f32 %v469, %v400
  %v472 = vmax.f32 %v470, %v403
  %v473 = vmax.f32 %v471, %v405
  %v474 = vmax.f32 %v472, %v473
  %v475 = vrot.slane %v474, 4
  %v476 = vmax.f32 %v474, %v475
  %v477 = vrot.slane %v476, 2
  %v478 = vmax.f32 %v476, %v477
  %v479 = vrot.slane %v478, 1
  %v480 = vmax.f32 %v478, %v479
  %v481 = vsub.f32 %v239, %v443
  %v482 = vsub.f32 %v328, %v480
  %v483 = vsub.f32 %v241, %v443
  %v484 = vsub.f32 %v330, %v480
  %v485 = vsub.f32 %v244, %v443
  %v486 = vsub.f32 %v333, %v480
  %v487 = vsub.f32 %v246, %v443
  %v488 = vsub.f32 %v335, %v480
  %v489 = vsub.f32 %v249, %v443
  %v490 = vsub.f32 %v338, %v480
  %v491 = vsub.f32 %v251, %v443
  %v492 = vsub.f32 %v340, %v480
  %v493 = vsub.f32 %v254, %v443
  %v494 = vsub.f32 %v343, %v480
  %v495 = vsub.f32 %v256, %v443
  %v496 = vsub.f32 %v345, %v480
  %v497 = vsub.f32 %v259, %v443
  %v498 = vsub.f32 %v348, %v480
  %v499 = vsub.f32 %v261, %v443
  %v500 = vsub.f32 %v350, %v480
  %v501 = vsub.f32 %v264, %v443
  %v502 = vsub.f32 %v353, %v480
  %v503 = vsub.f32 %v266, %v443
  %v504 = vsub.f32 %v355, %v480
  %v505 = vsub.f32 %v269, %v443
  %v506 = vsub.f32 %v358, %v480
  %v507 = vsub.f32 %v271, %v443
  %v508 = vsub.f32 %v360, %v480
  %v509 = vsub.f32 %v274, %v443
  %v510 = vsub.f32 %v363, %v480
  %v511 = vsub.f32 %v276, %v443
  %v512 = vsub.f32 %v365, %v480
  %v513 = vsub.f32 %v279, %v443
  %v514 = vsub.f32 %v368, %v480
  %v515 = vsub.f32 %v281, %v443
  %v516 = vsub.f32 %v370, %v480
  %v517 = vsub.f32 %v284, %v443
  %v518 = vsub.f32 %v373, %v480
  %v519 = vsub.f32 %v286, %v443
  %v520 = vsub.f32 %v375, %v480
  %v521 = vsub.f32 %v289, %v443
  %v522 = vsub.f32 %v378, %v480
  %v523 = vsub.f32 %v291, %v443
  %v524 = vsub.f32 %v380, %v480
  %v525 = vsub.f32 %v294, %v443
  %v526 = vsub.f32 %v383, %v480
  %v527 = vsub.f32 %v296, %v443
  %v528 = vsub.f32 %v385, %v480
  %v529 = vsub.f32 %v299, %v443
  %v530 = vsub.f32 %v388, %v480
  %v531 = vsub.f32 %v301, %v443
  %v532 = vsub.f32 %v390, %v480
  %v533 = vsub.f32 %v304, %v443
  %v534 = vsub.f32 %v393, %v480
  %v535 = vsub.f32 %v306, %v443
  %v536 = vsub.f32 %v395, %v480
  %v537 = vsub.f32 %v309, %v443
  %v538 = vsub.f32 %v398, %v480
  %v539 = vsub.f32 %v311, %v443
  %v540 = vsub.f32 %v400, %v480
  %v541 = vsub.f32 %v314, %v443
  %v542 = vsub.f32 %v403, %v480
  %v543 = vsub.f32 %v316, %v443
  %v544 = vsub.f32 %v405, %v480
  %v545 = vmul.f32 %v481, 1.442695
  %v546 = vpow.pop %v545
  %v547 = vmul.f32 %v482, 1.442695
  %v548 = vpow.pop %v547
  %v549 = vmul.f32 %v483, 1.442695
  %v550 = vpow.pop %v549
  %v551 = vmul.f32 %v484, 1.442695
  %v552 = vpow.pop %v551
  %v553 = vmul.f32 %v485, 1.442695
  %v554 = vpow.pop %v553
  %v555 = vmul.f32 %v486, 1.442695
  %v556 = vpow.pop %v555
  %v557 = vmul.f32 %v487, 1.442695
  %v558 = vpow.pop %v557
  %v559 = vmul.f32 %v488, 1.442695
  %v560 = vpow.pop %v559
  %v561 = vmul.f32 %v489, 1.442695
  %v562 = vpow.pop %v561
  %v563 = vmul.f32 %v490, 1.442695
  %v564 = vpow.pop %v563
  %v565 = vmul.f32 %v491, 1.442695
  %v566 = vpow.pop %v565
  %v567 = vmul.f32 %v492, 1.442695
  %v568 = vpow.pop %v567
  %v569 = vmul.f32 %v493, 1.442695
  %v570 = vpow.pop %v569
  %v571 = vmul.f32 %v494, 1.442695
  %v572 = vpow.pop %v571
  %v573 = vmul.f32 %v495, 1.442695
  %v574 = vpow.pop %v573
  %v575 = vmul.f32 %v496, 1.442695
  %v576 = vpow.pop %v575
  %v577 = vmul.f32 %v497, 1.442695
  %v578 = vpow.pop %v577
  %v579 = vmul.f32 %v498, 1.442695
  %v580 = vpow.pop %v579
  %v581 = vmul.f32 %v499, 1.442695
  %v582 = vpow.pop %v581
  %v583 = vmul.f32 %v500, 1.442695
  %v584 = vpow.pop %v583
  %v585 = vmul.f32 %v501, 1.442695
  %v586 = vpow.pop %v585
  %v587 = vmul.f32 %v502, 1.442695
  %v588 = vpow.pop %v587
  %v589 = vmul.f32 %v503, 1.442695
  %v590 = vpow.pop %v589
  %v591 = vmul.f32 %v504, 1.442695
  %v592 = vpow.pop %v591
  %v593 = vmul.f32 %v505, 1.442695
  %v594 = vpow.pop %v593
  %v595 = vmul.f32 %v506, 1.442695
  %v596 = vpow.pop %v595
  %v597 = vmul.f32 %v507, 1.442695
  %v598 = vpow.pop %v597
  %v599 = vmul.f32 %v508, 1.442695
  %v600 = vpow.pop %v599
  %v601 = vmul.f32 %v509, 1.442695
  %v602 = vpow.pop %v601
  %v603 = vmul.f32 %v510, 1.442695
  %v604 = vpow.pop %v603
  %v605 = vmul.f32 %v511, 1.442695
  %v606 = vpow.pop %v605
  %v607 = vmul.f32 %v512, 1.442695
  %v608 = vpow.pop %v607
  %v609 = vmul.f32 %v513, 1.442695
  %v610 = vpow.pop %v609
  %v611 = vmul.f32 %v514, 1.442695
  %v612 = vpow.pop %v611
  %v613 = vmul.f32 %v515, 1.442695
  %v614 = vpow.pop %v613
  %v615 = vmul.f32 %v516, 1.442695
  %v616 = vpow.pop %v615
  %v617 = vmul.f32 %v517, 1.442695
  %v618 = vpow.pop %v617
  %v619 = vmul.f32 %v518, 1.442695
  %v620 = vpow.pop %v619
  %v621 = vmul.f32 %v519, 1.442695
  %v622 = vpow.pop %v621
  %v623 = vmul.f32 %v520, 1.442695
  %v624 = vpow.pop %v623
  %v625 = vmul.f32 %v521, 1.442695
  %v626 = vpow.pop %v625
  %v627 = vmul.f32 %v522, 1.442695
  %v628 = vpow.pop %v627
  %v629 = vmul.f32 %v523, 1.442695
  %v630 = vpow.pop %v629
  %v631 = vmul.f32 %v524, 1.442695
  %v632 = vpow.pop %v631
  %v633 = vmul.f32 %v525, 1.442695
  %v634 = vpow.pop %v633
  %v635 = vmul.f32 %v526, 1.442695
  %v636 = vpow.pop %v635
  %v637 = vmul.f32 %v527, 1.442695
  %v638 = vpow.pop %v637
  %v639 = vmul.f32 %v528, 1.442695
  %v640 = vpow.pop %v639
  %v641 = vmul.f32 %v529, 1.442695
  %v642 = vpow.pop %v641
  %v643 = vmul.f32 %v530, 1.442695
  %v644 = vpow.pop %v643
  %v645 = vmul.f32 %v531, 1.442695
  %v646 = vpow.pop %v645
  %v647 = vmul.f32 %v532, 1.442695
  %v648 = vpow.pop %v647
  %v649 = vmul.f32 %v533, 1.442695
  %v650 = vpow.pop %v649
  %v651 = vmul.f32 %v534, 1.442695
  %v652 = vpow.pop %v651
  %v653 = vmul.f32 %v535, 1.442695
  %v654 = vpow.pop %v653
  %v655 = vmul.f32 %v536, 1.442695
  %v656 = vpow.pop %v655
  %v657 = vmul.f32 %v537, 1.442695
  %v658 = vpow.pop %v657
  %v659 = vmul.f32 %v538, 1.442695
  %v660 = vpow.pop %v659
  %v661 = vmul.f32 %v539, 1.442695
  %v662 = vpow.pop %v661
  %v663 = vmul.f32 %v540, 1.442695
  %v664 = vpow.pop %v663
  %v665 = vmul.f32 %v541, 1.442695
  %v666 = vpow.pop %v665
  %v667 = vmul.f32 %v542, 1.442695
  %v668 = vpow.pop %v667
  %v669 = vmul.f32 %v543, 1.442695
  %v670 = vpow.pop %v669
  %v671 = vmul.f32 %v544, 1.442695
  %v672 = vpow.pop %v671
  %v673 = vadd.f32 %v546, %v550
  %v674 = vadd.f32 %v673, %v554
  %v675 = vadd.f32 %v674, %v558
  %v676 = vadd.f32 %v675, %v562
  %v677 = vadd.f32 %v676, %v566
  %v678 = vadd.f32 %v677, %v570
  %v679 = vadd.f32 %v678, %v574
  %v680 = vadd.f32 %v679, %v578
  %v681 = vadd.f32 %v680, %v582
  %v682 = vadd.f32 %v681, %v586
  %v683 = vadd.f32 %v682, %v590
  %v684 = vadd.f32 %v683, %v594
  %v685 = vadd.f32 %v684, %v598
  %v686 = vadd.f32 %v685, %v602
  %v687 = vadd.f32 %v686, %v606
  %v688 = vadd.f32 %v687, %v610
  %v689 = vadd.f32 %v688, %v614
  %v690 = vadd.f32 %v689, %v618
  %v691 = vadd.f32 %v690, %v622
  %v692 = vadd.f32 %v691, %v626
  %v693 = vadd.f32 %v692, %v630
  %v694 = vadd.f32 %v693, %v634
  %v695 = vadd.f32 %v694, %v638
  %v696 = vadd.f32 %v695, %v642
  %v697 = vadd.f32 %v696, %v646
  %v698 = vadd.f32 %v697, %v650
  %v699 = vadd.f32 %v698, %v654
  %v700 = vadd.f32 %v699, %v658
  %v701 = vadd.f32 %v700, %v662
  %v702 = vadd.f32 %v701, %v666
  %v703 = vadd.f32 %v702, %v670
  %v704 = vrot.slane %v703, 4
  %v705 = vadd.f32 %v703, %v704
  %v706 = vrot.slane %v705, 2
  %v707 = vadd.f32 %v705, %v706
  %v708 = vrot.slane %v707, 1
  %v709 = vadd.f32 %v707, %v708
  %v710 = vadd.f32 %v548, %v552
  %v711 = vadd.f32 %v710, %v556
  %v712 = vadd.f32 %v711, %v560
  %v713 = vadd.f32 %v712, %v564
  %v714 = vadd.f32 %v713, %v568
  %v715 = vadd.f32 %v714, %v572
  %v716 = vadd.f32 %v715, %v576
  %v717 = vadd.f32 %v716, %v580
  %v718 = vadd.f32 %v717, %v584
  %v719 = vadd.f32 %v718, %v588
  %v720 = vadd.f32 %v719, %v592
  %v721 = vadd.f32 %v720, %v596
  %v722 = vadd.f32 %v721, %v600
  %v723 = vadd.f32 %v722, %v604
  %v724 = vadd.f32 %v723, %v608
  %v725 = vadd.f32 %v724, %v612
  %v726 = vadd.f32 %v725, %v616
  %v727 = vadd.f32 %v726, %v620
  %v728 = vadd.f32 %v727, %v624
  %v729 = vadd.f32 %v728, %v628
  %v730 = vadd.f32 %v729, %v632
  %v731 = vadd.f32 %v730, %v636
  %v732 = vadd.f32 %v731, %v640
  %v733 = vadd.f32 %v732, %v644
  %v734 = vadd.f32 %v733, %v648
  %v735 = vadd.f32 %v734, %v652
  %v736 = vadd.f32 %v735, %v656
  %v737 = vadd.f32 %v736, %v660
  %v738 = vadd.f32 %v737, %v664
  %v739 = vadd.f32 %v738, %v668
  %v740 = vadd.f32 %v739, %v672
  %v741 = vrot.slane %v740, 4
  %v742 = vadd.f32 %v740, %v741
  %v743 = vrot.slane %v742, 2
  %v744 = vadd.f32 %v742, %v743
  %v745 = vrot.slane %v744, 1
  %v746 = vadd.f32 %v744, %v745
  %v747 = vpack.c.bf16 %v105, %v105
  %v748 = vpack.c.bf16 %v137, %v137
  %v749 = vpack.c.bf16 %v550, %v546
  %v750 = vpack.c.bf16 %v552, %v548
  %v751 = vpack.c.bf16 %v558, %v554
  %v752 = vpack.c.bf16 %v560, %v556
  %v753 = vpack.c.bf16 %v566, %v562
  %v754 = vpack.c.bf16 %v568, %v564
  %v755 = vpack.c.bf16 %v574, %v570
  %v756 = vpack.c.bf16 %v576, %v572
  %v757 = vpack.c.bf16 %v582, %v578
  %v758 = vpack.c.bf16 %v584, %v580
  %v759 = vpack.c.bf16 %v590, %v586
  %v760 = vpack.c.bf16 %v592, %v588
  %v761 = vpack.c.bf16 %v598, %v594
  %v762 = vpack.c.bf16 %v600, %v596
  %v763 = vpack.c.bf16 %v606, %v602
  %v764 = vpack.c.bf16 %v608, %v604
  %v765 = vpack.c.bf16 %v614, %v610
  %v766 = vpack.c.bf16 %v616, %v612
  %v767 = vpack.c.bf16 %v622, %v618
  %v768 = vpack.c.bf16 %v624, %v620
  %v769 = vpack.c.bf16 %v630, %v626
  %v770 = vpack.c.bf16 %v632, %v628
  %v771 = vpack.c.bf16 %v638, %v634
  %v772 = vpack.c.bf16 %v640, %v636
  %v773 = vpack.c.bf16 %v646, %v642
  %v774 = vpack.c.bf16 %v648, %v644
  %v775 = vpack.c.bf16 %v654, %v650
  %v776 = vpack.c.bf16 %v656, %v652
  %v777 = vpack.c.bf16 %v662, %v658
  %v778 = vpack.c.bf16 %v664, %v660
  %v779 = vpack.c.bf16 %v670, %v666
  %v780 = vpack.c.bf16 %v672, %v668
  %781 = vmatpush.bf16.msra.mxu0 %v763
  %782 = vmatpush.bf16.msra.mxu0 %v761
  %783 = vmatpush.bf16.msra.mxu0 %v759
  %784 = vmatpush.bf16.msra.mxu0 %v757
  %785 = vmatpush.bf16.msra.mxu0 %v755
  %786 = vmatpush.bf16.msra.mxu0 %v753
  %787 = vmatpush.bf16.msra.mxu0 %v751
  %788 = vmatpush.bf16.msra.mxu0 %v749
  %789 = vmatmul.bf16.gmra.mxu0 %v747
  %v790 = vpop.f32.mrf.mxu0
  %v791 = vadd.f32 0.0, %v790
  %v792 = vpop.f32.mrf.mxu0
  %793 = vdwg.mxu0
  %794 = vmatpush.bf16.msra.mxu0 %v779
  %795 = vmatpush.bf16.msra.mxu0 %v777
  %796 = vmatpush.bf16.msra.mxu0 %v775
  %797 = vmatpush.bf16.msra.mxu0 %v773
  %798 = vmatpush.bf16.msra.mxu0 %v771
  %799 = vmatpush.bf16.msra.mxu0 %v769
  %800 = vmatpush.bf16.msra.mxu0 %v767
  %801 = vmatpush.bf16.msra.mxu0 %v765
  %802 = vmatmul.bf16.gmra.mxu0 %v748
  %v803 = vpop.f32.mrf.mxu0
  %v804 = vadd.f32 %v791, %v803
  %v805 = vpop.f32.mrf.mxu0
  %806 = vdwg.mxu0
  %807 = vmatpush.bf16.msra.mxu0 %v764
  %808 = vmatpush.bf16.msra.mxu0 %v762
  %809 = vmatpush.bf16.msra.mxu0 %v760
  %810 = vmatpush.bf16.msra.mxu0 %v758
  %811 = vmatpush.bf16.msra.mxu0 %v756
  %812 = vmatpush.bf16.msra.mxu0 %v754
  %813 = vmatpush.bf16.msra.mxu0 %v752
  %814 = vmatpush.bf16.msra.mxu0 %v750
  %815 = vmatmul.bf16.gmra.mxu0 %v747
  %v816 = vpop.f32.mrf.mxu0
  %v817 = vadd.f32 0.0, %v816
  %v818 = vpop.f32.mrf.mxu0
  %819 = vdwg.mxu0
  %820 = vmatpush.bf16.msra.mxu0 %v780
  %821 = vmatpush.bf16.msra.mxu0 %v778
  %822 = vmatpush.bf16.msra.mxu0 %v776
  %823 = vmatpush.bf16.msra.mxu0 %v774
  %824 = vmatpush.bf16.msra.mxu0 %v772
  %825 = vmatpush.bf16.msra.mxu0 %v770
  %826 = vmatpush.bf16.msra.mxu0 %v768
  %827 = vmatpush.bf16.msra.mxu0 %v766
  %828 = vmatmul.bf16.gmra.mxu0 %v748
  %v829 = vpop.f32.mrf.mxu0
  %v830 = vadd.f32 %v817, %v829
  %v831 = vpop.f32.mrf.mxu0
  %832 = vdwg.mxu0
  %v833 = vrcp.pop %v709
  %v834 = vrcp.pop %v746
  %v835 = vmul.f32 %v804, %v833
  %v836 = vmul.f32 %v830, %v834
  %837 = vst [vmem:[%s4] sm:$0xff] %v835
  %838 = vst [vmem:[%s4 + $0x8] sm:$0xff] %v836
  %s839 = scalar_lea.vmem %s0, 16
  %v840 = vld [vmem:[%s839] sm:$0xff]
  %v841 = vld [vmem:[%s839 + $0x8] sm:$0xff]
  %842 = vmatpush.msra.mxu0 0.0
  %843 = vmatpush.msra.mxu0 0.0
  %844 = vmatpush.msra.mxu0 0.0
  %845 = vmatpush.msra.mxu0 0.0
  %846 = vmatpush.msra.mxu0 0.0
  %847 = vmatpush.msra.mxu0 0.0
  %848 = vmatpush.msra.mxu0 0.0
  %849 = vmatpush.msra.mxu0 0.0
  %850 = vmatpush.msra.mxu0 0.0
  %851 = vmatpush.msra.mxu0 0.0
  %852 = vmatpush.msra.mxu0 0.0
  %853 = vmatpush.msra.mxu0 0.0
  %854 = vmatpush.msra.mxu0 0.0
  %855 = vmatpush.msra.mxu0 0.0
  %856 = vmatpush.msra.mxu0 0.0
  %857 = vmatpush.msra.mxu0 %v840
  %858 = vmatmul.f32.gmra.mxu0 %v61
  %v859 = vpop.f32.mrf.mxu0
  %v860 = vadd.f32 %v37, %v859
  %861 = vmatmul.f32.gmra.mxu0 %v64
  %v862 = vpop.f32.mrf.mxu0
  %v863 = vadd.f32 %v42, %v862
  %864 = vmatmul.f32.gmra.mxu0 %v67
  %v865 = vpop.f32.mrf.mxu0
  %v866 = vadd.f32 %v47, %v865
  %867 = vmatmul.f32.gmra.mxu0 %v70
  %v868 = vpop.f32.mrf.mxu0
  %v869 = vadd.f32 %v52, %v868
  %870 = vmatmul.f32.gmra.mxu0 %v73
  %v871 = vpop.f32.mrf.mxu0
  %v872 = vadd.f32 %v57, %v871
  %873 = vdwg.mxu0
  %874 = vmatpush.msra.mxu0 0.0
  %875 = vmatpush.msra.mxu0 0.0
  %876 = vmatpush.msra.mxu0 0.0
  %877 = vmatpush.msra.mxu0 0.0
  %878 = vmatpush.msra.mxu0 0.0
  %879 = vmatpush.msra.mxu0 0.0
  %880 = vmatpush.msra.mxu0 0.0
  %881 = vmatpush.msra.mxu0 0.0
  %882 = vmatpush.msra.mxu0 0.0
  %883 = vmatpush.msra.mxu0 0.0
  %884 = vmatpush.msra.mxu0 0.0
  %885 = vmatpush.msra.mxu0 0.0
  %886 = vmatpush.msra.mxu0 0.0
  %887 = vmatpush.msra.mxu0 0.0
  %888 = vmatpush.msra.mxu0 0.0
  %889 = vmatpush.msra.mxu0 %v841
  %890 = vmatmul.f32.gmra.mxu0 %v61
  %v891 = vpop.f32.mrf.mxu0
  %v892 = vadd.f32 %v37, %v891
  %893 = vmatmul.f32.gmra.mxu0 %v64
  %v894 = vpop.f32.mrf.mxu0
  %v895 = vadd.f32 %v42, %v894
  %896 = vmatmul.f32.gmra.mxu0 %v67
  %v897 = vpop.f32.mrf.mxu0
  %v898 = vadd.f32 %v47, %v897
  %899 = vmatmul.f32.gmra.mxu0 %v70
  %v900 = vpop.f32.mrf.mxu0
  %v901 = vadd.f32 %v52, %v900
  %902 = vmatmul.f32.gmra.mxu0 %v73
  %v903 = vpop.f32.mrf.mxu0
  %v904 = vadd.f32 %v57, %v903
  %905 = vdwg.mxu0
  %v906 = vpack.c.bf16 %v863, %v860
  %v907 = vpack.c.bf16 %v895, %v892
  %v908 = vpack.c.bf16 %v866, %v866
  %v909 = vpack.c.bf16 %v898, %v898
  %v910 = vpack.c.bf16 %v28, %v869
  %v911 = vpack.c.bf16 %v29, %v901
  %912 = vxpose.binary.xlu0.c.b16.start [1/16] %v907, %v906, 128
  %913 = vxpose.binary.xlu0.c.b16.cont [2/16] %v909, %v908, 128
  %914 = vxpose.binary.xlu0.c.b16.cont [3/16] 0, 0, 128
  %915 = vxpose.binary.xlu0.c.b16.cont [4/16] 0, 0, 128
  %916 = vxpose.binary.xlu0.c.b16.cont [5/16] 0, 0, 128
  %917 = vxpose.binary.xlu0.c.b16.cont [6/16] 0, 0, 128
  %918 = vxpose.binary.xlu0.c.b16.cont [7/16] 0, 0, 128
  %919 = vxpose.binary.xlu0.c.b16.end [8/16] 0, 0, 128
  %v920 = vpop.trf.xlu0
  %v921 = vpop.trf.xlu0
  %v922 = vpop.trf.xlu0
  %v923 = vpop.trf.xlu0
  %v924 = vpop.trf.xlu0
  %v925 = vpop.trf.xlu0
  %v926 = vpop.trf.xlu0
  %v927 = vpop.trf.xlu0
  %v928 = vpop.trf.xlu0
  %v929 = vpop.trf.xlu0
  %v930 = vpop.trf.xlu0
  %v931 = vpop.trf.xlu0
  %v932 = vpop.trf.xlu0
  %v933 = vpop.trf.xlu0
  %v934 = vpop.trf.xlu0
  %v935 = vpop.trf.xlu0
  %v937 = vsel %vm171, %v920, 0
  %v940 = vsel %vm171, %v922, 0
  %v943 = vsel %vm171, %v924, 0
  %v946 = vsel %vm171, %v926, 0
  %v949 = vsel %vm171, %v928, 0
  %v952 = vsel %vm171, %v930, 0
  %v955 = vsel %vm171, %v932, 0
  %v958 = vsel %vm171, %v934, 0
  %v961 = vsel %vm171, %v921, 0
  %v964 = vsel %vm171, %v923, 0
  %v967 = vsel %vm171, %v925, 0
  %v970 = vsel %vm171, %v927, 0
  %v973 = vsel %vm171, %v929, 0
  %v976 = vsel %vm171, %v931, 0
  %v979 = vsel %vm171, %v933, 0
  %v982 = vsel %vm171, %v935, 0
  %984 = vmatpush.bf16.msra.mxu0 0
  %985 = vmatpush.bf16.msra.mxu0 0
  %986 = vmatpush.bf16.msra.mxu0 0
  %987 = vmatpush.bf16.msra.mxu0 0
  %988 = vmatpush.bf16.msra.mxu0 0
  %989 = vmatpush.bf16.msra.mxu0 0
  %990 = vmatpush.bf16.msra.mxu0 %v224
  %991 = vmatpush.bf16.msra.mxu0 %v910
  %992 = vmatmul.bf16.gmra.mxu0 %v937
  %v993 = vpop.f32.mrf.mxu0
  %v994 = vadd.f32 0.0, %v993
  %v995 = vpop.f32.mrf.mxu0
  %v996 = vadd.f32 0.0, %v995
  %997 = vmatmul.bf16.gmra.mxu0 %v940
  %v998 = vpop.f32.mrf.mxu0
  %v999 = vadd.f32 0.0, %v998
  %v1000 = vpop.f32.mrf.mxu0
  %v1001 = vadd.f32 0.0, %v1000
  %1002 = vmatmul.bf16.gmra.mxu0 %v943
  %v1003 = vpop.f32.mrf.mxu0
  %v1004 = vadd.f32 0.0, %v1003
  %v1005 = vpop.f32.mrf.mxu0
  %v1006 = vadd.f32 0.0, %v1005
  %1007 = vmatmul.bf16.gmra.mxu0 %v946
  %v1008 = vpop.f32.mrf.mxu0
  %v1009 = vadd.f32 0.0, %v1008
  %v1010 = vpop.f32.mrf.mxu0
  %v1011 = vadd.f32 0.0, %v1010
  %1012 = vmatmul.bf16.gmra.mxu0 %v949
  %v1013 = vpop.f32.mrf.mxu0
  %v1014 = vadd.f32 0.0, %v1013
  %v1015 = vpop.f32.mrf.mxu0
  %v1016 = vadd.f32 0.0, %v1015
  %1017 = vmatmul.bf16.gmra.mxu0 %v952
  %v1018 = vpop.f32.mrf.mxu0
  %v1019 = vadd.f32 0.0, %v1018
  %v1020 = vpop.f32.mrf.mxu0
  %v1021 = vadd.f32 0.0, %v1020
  %1022 = vmatmul.bf16.gmra.mxu0 %v955
  %v1023 = vpop.f32.mrf.mxu0
  %v1024 = vadd.f32 0.0, %v1023
  %v1025 = vpop.f32.mrf.mxu0
  %v1026 = vadd.f32 0.0, %v1025
  %1027 = vmatmul.bf16.gmra.mxu0 %v958
  %v1028 = vpop.f32.mrf.mxu0
  %v1029 = vadd.f32 0.0, %v1028
  %v1030 = vpop.f32.mrf.mxu0
  %v1031 = vadd.f32 0.0, %v1030
  %1032 = vmatmul.bf16.gmra.mxu0 %v961
  %v1033 = vpop.f32.mrf.mxu0
  %v1034 = vadd.f32 0.0, %v1033
  %v1035 = vpop.f32.mrf.mxu0
  %v1036 = vadd.f32 0.0, %v1035
  %1037 = vmatmul.bf16.gmra.mxu0 %v964
  %v1038 = vpop.f32.mrf.mxu0
  %v1039 = vadd.f32 0.0, %v1038
  %v1040 = vpop.f32.mrf.mxu0
  %v1041 = vadd.f32 0.0, %v1040
  %1042 = vmatmul.bf16.gmra.mxu0 %v967
  %v1043 = vpop.f32.mrf.mxu0
  %v1044 = vadd.f32 0.0, %v1043
  %v1045 = vpop.f32.mrf.mxu0
  %v1046 = vadd.f32 0.0, %v1045
  %1047 = vmatmul.bf16.gmra.mxu0 %v970
  %v1048 = vpop.f32.mrf.mxu0
  %v1049 = vadd.f32 0.0, %v1048
  %v1050 = vpop.f32.mrf.mxu0
  %v1051 = vadd.f32 0.0, %v1050
  %1052 = vmatmul.bf16.gmra.mxu0 %v973
  %v1053 = vpop.f32.mrf.mxu0
  %v1054 = vadd.f32 0.0, %v1053
  %v1055 = vpop.f32.mrf.mxu0
  %v1056 = vadd.f32 0.0, %v1055
  %1057 = vmatmul.bf16.gmra.mxu0 %v976
  %v1058 = vpop.f32.mrf.mxu0
  %v1059 = vadd.f32 0.0, %v1058
  %v1060 = vpop.f32.mrf.mxu0
  %v1061 = vadd.f32 0.0, %v1060
  %1062 = vmatmul.bf16.gmra.mxu0 %v979
  %v1063 = vpop.f32.mrf.mxu0
  %v1064 = vadd.f32 0.0, %v1063
  %v1065 = vpop.f32.mrf.mxu0
  %v1066 = vadd.f32 0.0, %v1065
  %1067 = vmatmul.bf16.gmra.mxu0 %v982
  %v1068 = vpop.f32.mrf.mxu0
  %v1069 = vadd.f32 0.0, %v1068
  %v1070 = vpop.f32.mrf.mxu0
  %v1071 = vadd.f32 0.0, %v1070
  %1072 = vdwg.mxu0
  %1073 = vmatpush.bf16.msra.mxu0 0
  %1074 = vmatpush.bf16.msra.mxu0 0
  %1075 = vmatpush.bf16.msra.mxu0 0
  %1076 = vmatpush.bf16.msra.mxu0 0
  %1077 = vmatpush.bf16.msra.mxu0 0
  %1078 = vmatpush.bf16.msra.mxu0 0
  %1079 = vmatpush.bf16.msra.mxu0 %v227
  %1080 = vmatpush.bf16.msra.mxu0 %v911
  %1081 = vmatmul.bf16.gmra.mxu0 %v937
  %v1082 = vpop.f32.mrf.mxu0
  %v1083 = vadd.f32 0.0, %v1082
  %v1084 = vpop.f32.mrf.mxu0
  %v1085 = vadd.f32 0.0, %v1084
  %1086 = vmatmul.bf16.gmra.mxu0 %v940
  %v1087 = vpop.f32.mrf.mxu0
  %v1088 = vadd.f32 0.0, %v1087
  %v1089 = vpop.f32.mrf.mxu0
  %v1090 = vadd.f32 0.0, %v1089
  %1091 = vmatmul.bf16.gmra.mxu0 %v943
  %v1092 = vpop.f32.mrf.mxu0
  %v1093 = vadd.f32 0.0, %v1092
  %v1094 = vpop.f32.mrf.mxu0
  %v1095 = vadd.f32 0.0, %v1094
  %1096 = vmatmul.bf16.gmra.mxu0 %v946
  %v1097 = vpop.f32.mrf.mxu0
  %v1098 = vadd.f32 0.0, %v1097
  %v1099 = vpop.f32.mrf.mxu0
  %v1100 = vadd.f32 0.0, %v1099
  %1101 = vmatmul.bf16.gmra.mxu0 %v949
  %v1102 = vpop.f32.mrf.mxu0
  %v1103 = vadd.f32 0.0, %v1102
  %v1104 = vpop.f32.mrf.mxu0
  %v1105 = vadd.f32 0.0, %v1104
  %1106 = vmatmul.bf16.gmra.mxu0 %v952
  %v1107 = vpop.f32.mrf.mxu0
  %v1108 = vadd.f32 0.0, %v1107
  %v1109 = vpop.f32.mrf.mxu0
  %v1110 = vadd.f32 0.0, %v1109
  %1111 = vmatmul.bf16.gmra.mxu0 %v955
  %v1112 = vpop.f32.mrf.mxu0
  %v1113 = vadd.f32 0.0, %v1112
  %v1114 = vpop.f32.mrf.mxu0
  %v1115 = vadd.f32 0.0, %v1114
  %1116 = vmatmul.bf16.gmra.mxu0 %v958
  %v1117 = vpop.f32.mrf.mxu0
  %v1118 = vadd.f32 0.0, %v1117
  %v1119 = vpop.f32.mrf.mxu0
  %v1120 = vadd.f32 0.0, %v1119
  %1121 = vmatmul.bf16.gmra.mxu0 %v961
  %v1122 = vpop.f32.mrf.mxu0
  %v1123 = vadd.f32 0.0, %v1122
  %v1124 = vpop.f32.mrf.mxu0
  %v1125 = vadd.f32 0.0, %v1124
  %1126 = vmatmul.bf16.gmra.mxu0 %v964
  %v1127 = vpop.f32.mrf.mxu0
  %v1128 = vadd.f32 0.0, %v1127
  %v1129 = vpop.f32.mrf.mxu0
  %v1130 = vadd.f32 0.0, %v1129
  %1131 = vmatmul.bf16.gmra.mxu0 %v967
  %v1132 = vpop.f32.mrf.mxu0
  %v1133 = vadd.f32 0.0, %v1132
  %v1134 = vpop.f32.mrf.mxu0
  %v1135 = vadd.f32 0.0, %v1134
  %1136 = vmatmul.bf16.gmra.mxu0 %v970
  %v1137 = vpop.f32.mrf.mxu0
  %v1138 = vadd.f32 0.0, %v1137
  %v1139 = vpop.f32.mrf.mxu0
  %v1140 = vadd.f32 0.0, %v1139
  %1141 = vmatmul.bf16.gmra.mxu0 %v973
  %v1142 = vpop.f32.mrf.mxu0
  %v1143 = vadd.f32 0.0, %v1142
  %v1144 = vpop.f32.mrf.mxu0
  %v1145 = vadd.f32 0.0, %v1144
  %1146 = vmatmul.bf16.gmra.mxu0 %v976
  %v1147 = vpop.f32.mrf.mxu0
  %v1148 = vadd.f32 0.0, %v1147
  %v1149 = vpop.f32.mrf.mxu0
  %v1150 = vadd.f32 0.0, %v1149
  %1151 = vmatmul.bf16.gmra.mxu0 %v979
  %v1152 = vpop.f32.mrf.mxu0
  %v1153 = vadd.f32 0.0, %v1152
  %v1154 = vpop.f32.mrf.mxu0
  %v1155 = vadd.f32 0.0, %v1154
  %1156 = vmatmul.bf16.gmra.mxu0 %v982
  %v1157 = vpop.f32.mrf.mxu0
  %v1158 = vadd.f32 0.0, %v1157
  %v1159 = vpop.f32.mrf.mxu0
  %v1160 = vadd.f32 0.0, %v1159
  %1161 = vdwg.mxu0
  %v1162 = vmax.f32 %v994, %v999
  %v1163 = vmax.f32 %v996, %v1001
  %v1164 = vmax.f32 %v1162, %v1004
  %v1165 = vmax.f32 %v1163, %v1006
  %v1166 = vmax.f32 %v1164, %v1009
  %v1167 = vmax.f32 %v1165, %v1011
  %v1168 = vmax.f32 %v1166, %v1014
  %v1169 = vmax.f32 %v1167, %v1016
  %v1170 = vmax.f32 %v1168, %v1019
  %v1171 = vmax.f32 %v1169, %v1021
  %v1172 = vmax.f32 %v1170, %v1024
  %v1173 = vmax.f32 %v1171, %v1026
  %v1174 = vmax.f32 %v1172, %v1029
  %v1175 = vmax.f32 %v1173, %v1031
  %v1176 = vmax.f32 %v1174, %v1034
  %v1177 = vmax.f32 %v1175, %v1036
  %v1178 = vmax.f32 %v1176, %v1039
  %v1179 = vmax.f32 %v1177, %v1041
  %v1180 = vmax.f32 %v1178, %v1044
  %v1181 = vmax.f32 %v1179, %v1046
  %v1182 = vmax.f32 %v1180, %v1049
  %v1183 = vmax.f32 %v1181, %v1051
  %v1184 = vmax.f32 %v1182, %v1054
  %v1185 = vmax.f32 %v1183, %v1056
  %v1186 = vmax.f32 %v1184, %v1059
  %v1187 = vmax.f32 %v1185, %v1061
  %v1188 = vmax.f32 %v1186, %v1064
  %v1189 = vmax.f32 %v1187, %v1066
  %v1190 = vmax.f32 %v1188, %v1069
  %v1191 = vmax.f32 %v1189, %v1071
  %v1192 = vmax.f32 %v1190, %v1191
  %v1193 = vrot.slane %v1192, 4
  %v1194 = vmax.f32 %v1192, %v1193
  %v1195 = vrot.slane %v1194, 2
  %v1196 = vmax.f32 %v1194, %v1195
  %v1197 = vrot.slane %v1196, 1
  %v1198 = vmax.f32 %v1196, %v1197
  %v1199 = vmax.f32 %v1083, %v1088
  %v1200 = vmax.f32 %v1085, %v1090
  %v1201 = vmax.f32 %v1199, %v1093
  %v1202 = vmax.f32 %v1200, %v1095
  %v1203 = vmax.f32 %v1201, %v1098
  %v1204 = vmax.f32 %v1202, %v1100
  %v1205 = vmax.f32 %v1203, %v1103
  %v1206 = vmax.f32 %v1204, %v1105
  %v1207 = vmax.f32 %v1205, %v1108
  %v1208 = vmax.f32 %v1206, %v1110
  %v1209 = vmax.f32 %v1207, %v1113
  %v1210 = vmax.f32 %v1208, %v1115
  %v1211 = vmax.f32 %v1209, %v1118
  %v1212 = vmax.f32 %v1210, %v1120
  %v1213 = vmax.f32 %v1211, %v1123
  %v1214 = vmax.f32 %v1212, %v1125
  %v1215 = vmax.f32 %v1213, %v1128
  %v1216 = vmax.f32 %v1214, %v1130
  %v1217 = vmax.f32 %v1215, %v1133
  %v1218 = vmax.f32 %v1216, %v1135
  %v1219 = vmax.f32 %v1217, %v1138
  %v1220 = vmax.f32 %v1218, %v1140
  %v1221 = vmax.f32 %v1219, %v1143
  %v1222 = vmax.f32 %v1220, %v1145
  %v1223 = vmax.f32 %v1221, %v1148
  %v1224 = vmax.f32 %v1222, %v1150
  %v1225 = vmax.f32 %v1223, %v1153
  %v1226 = vmax.f32 %v1224, %v1155
  %v1227 = vmax.f32 %v1225, %v1158
  %v1228 = vmax.f32 %v1226, %v1160
  %v1229 = vmax.f32 %v1227, %v1228
  %v1230 = vrot.slane %v1229, 4
  %v1231 = vmax.f32 %v1229, %v1230
  %v1232 = vrot.slane %v1231, 2
  %v1233 = vmax.f32 %v1231, %v1232
  %v1234 = vrot.slane %v1233, 1
  %v1235 = vmax.f32 %v1233, %v1234
  %v1236 = vsub.f32 %v994, %v1198
  %v1237 = vsub.f32 %v1083, %v1235
  %v1238 = vsub.f32 %v996, %v1198
  %v1239 = vsub.f32 %v1085, %v1235
  %v1240 = vsub.f32 %v999, %v1198
  %v1241 = vsub.f32 %v1088, %v1235
  %v1242 = vsub.f32 %v1001, %v1198
  %v1243 = vsub.f32 %v1090, %v1235
  %v1244 = vsub.f32 %v1004, %v1198
  %v1245 = vsub.f32 %v1093, %v1235
  %v1246 = vsub.f32 %v1006, %v1198
  %v1247 = vsub.f32 %v1095, %v1235
  %v1248 = vsub.f32 %v1009, %v1198
  %v1249 = vsub.f32 %v1098, %v1235
  %v1250 = vsub.f32 %v1011, %v1198
  %v1251 = vsub.f32 %v1100, %v1235
  %v1252 = vsub.f32 %v1014, %v1198
  %v1253 = vsub.f32 %v1103, %v1235
  %v1254 = vsub.f32 %v1016, %v1198
  %v1255 = vsub.f32 %v1105, %v1235
  %v1256 = vsub.f32 %v1019, %v1198
  %v1257 = vsub.f32 %v1108, %v1235
  %v1258 = vsub.f32 %v1021, %v1198
  %v1259 = vsub.f32 %v1110, %v1235
  %v1260 = vsub.f32 %v1024, %v1198
  %v1261 = vsub.f32 %v1113, %v1235
  %v1262 = vsub.f32 %v1026, %v1198
  %v1263 = vsub.f32 %v1115, %v1235
  %v1264 = vsub.f32 %v1029, %v1198
  %v1265 = vsub.f32 %v1118, %v1235
  %v1266 = vsub.f32 %v1031, %v1198
  %v1267 = vsub.f32 %v1120, %v1235
  %v1268 = vsub.f32 %v1034, %v1198
  %v1269 = vsub.f32 %v1123, %v1235
  %v1270 = vsub.f32 %v1036, %v1198
  %v1271 = vsub.f32 %v1125, %v1235
  %v1272 = vsub.f32 %v1039, %v1198
  %v1273 = vsub.f32 %v1128, %v1235
  %v1274 = vsub.f32 %v1041, %v1198
  %v1275 = vsub.f32 %v1130, %v1235
  %v1276 = vsub.f32 %v1044, %v1198
  %v1277 = vsub.f32 %v1133, %v1235
  %v1278 = vsub.f32 %v1046, %v1198
  %v1279 = vsub.f32 %v1135, %v1235
  %v1280 = vsub.f32 %v1049, %v1198
  %v1281 = vsub.f32 %v1138, %v1235
  %v1282 = vsub.f32 %v1051, %v1198
  %v1283 = vsub.f32 %v1140, %v1235
  %v1284 = vsub.f32 %v1054, %v1198
  %v1285 = vsub.f32 %v1143, %v1235
  %v1286 = vsub.f32 %v1056, %v1198
  %v1287 = vsub.f32 %v1145, %v1235
  %v1288 = vsub.f32 %v1059, %v1198
  %v1289 = vsub.f32 %v1148, %v1235
  %v1290 = vsub.f32 %v1061, %v1198
  %v1291 = vsub.f32 %v1150, %v1235
  %v1292 = vsub.f32 %v1064, %v1198
  %v1293 = vsub.f32 %v1153, %v1235
  %v1294 = vsub.f32 %v1066, %v1198
  %v1295 = vsub.f32 %v1155, %v1235
  %v1296 = vsub.f32 %v1069, %v1198
  %v1297 = vsub.f32 %v1158, %v1235
  %v1298 = vsub.f32 %v1071, %v1198
  %v1299 = vsub.f32 %v1160, %v1235
  %v1300 = vmul.f32 %v1236, 1.442695
  %v1301 = vpow.pop %v1300
  %v1302 = vmul.f32 %v1237, 1.442695
  %v1303 = vpow.pop %v1302
  %v1304 = vmul.f32 %v1238, 1.442695
  %v1305 = vpow.pop %v1304
  %v1306 = vmul.f32 %v1239, 1.442695
  %v1307 = vpow.pop %v1306
  %v1308 = vmul.f32 %v1240, 1.442695
  %v1309 = vpow.pop %v1308
  %v1310 = vmul.f32 %v1241, 1.442695
  %v1311 = vpow.pop %v1310
  %v1312 = vmul.f32 %v1242, 1.442695
  %v1313 = vpow.pop %v1312
  %v1314 = vmul.f32 %v1243, 1.442695
  %v1315 = vpow.pop %v1314
  %v1316 = vmul.f32 %v1244, 1.442695
  %v1317 = vpow.pop %v1316
  %v1318 = vmul.f32 %v1245, 1.442695
  %v1319 = vpow.pop %v1318
  %v1320 = vmul.f32 %v1246, 1.442695
  %v1321 = vpow.pop %v1320
  %v1322 = vmul.f32 %v1247, 1.442695
  %v1323 = vpow.pop %v1322
  %v1324 = vmul.f32 %v1248, 1.442695
  %v1325 = vpow.pop %v1324
  %v1326 = vmul.f32 %v1249, 1.442695
  %v1327 = vpow.pop %v1326
  %v1328 = vmul.f32 %v1250, 1.442695
  %v1329 = vpow.pop %v1328
  %v1330 = vmul.f32 %v1251, 1.442695
  %v1331 = vpow.pop %v1330
  %v1332 = vmul.f32 %v1252, 1.442695
  %v1333 = vpow.pop %v1332
  %v1334 = vmul.f32 %v1253, 1.442695
  %v1335 = vpow.pop %v1334
  %v1336 = vmul.f32 %v1254, 1.442695
  %v1337 = vpow.pop %v1336
  %v1338 = vmul.f32 %v1255, 1.442695
  %v1339 = vpow.pop %v1338
  %v1340 = vmul.f32 %v1256, 1.442695
  %v1341 = vpow.pop %v1340
  %v1342 = vmul.f32 %v1257, 1.442695
  %v1343 = vpow.pop %v1342
  %v1344 = vmul.f32 %v1258, 1.442695
  %v1345 = vpow.pop %v1344
  %v1346 = vmul.f32 %v1259, 1.442695
  %v1347 = vpow.pop %v1346
  %v1348 = vmul.f32 %v1260, 1.442695
  %v1349 = vpow.pop %v1348
  %v1350 = vmul.f32 %v1261, 1.442695
  %v1351 = vpow.pop %v1350
  %v1352 = vmul.f32 %v1262, 1.442695
  %v1353 = vpow.pop %v1352
  %v1354 = vmul.f32 %v1263, 1.442695
  %v1355 = vpow.pop %v1354
  %v1356 = vmul.f32 %v1264, 1.442695
  %v1357 = vpow.pop %v1356
  %v1358 = vmul.f32 %v1265, 1.442695
  %v1359 = vpow.pop %v1358
  %v1360 = vmul.f32 %v1266, 1.442695
  %v1361 = vpow.pop %v1360
  %v1362 = vmul.f32 %v1267, 1.442695
  %v1363 = vpow.pop %v1362
  %v1364 = vmul.f32 %v1268, 1.442695
  %v1365 = vpow.pop %v1364
  %v1366 = vmul.f32 %v1269, 1.442695
  %v1367 = vpow.pop %v1366
  %v1368 = vmul.f32 %v1270, 1.442695
  %v1369 = vpow.pop %v1368
  %v1370 = vmul.f32 %v1271, 1.442695
  %v1371 = vpow.pop %v1370
  %v1372 = vmul.f32 %v1272, 1.442695
  %v1373 = vpow.pop %v1372
  %v1374 = vmul.f32 %v1273, 1.442695
  %v1375 = vpow.pop %v1374
  %v1376 = vmul.f32 %v1274, 1.442695
  %v1377 = vpow.pop %v1376
  %v1378 = vmul.f32 %v1275, 1.442695
  %v1379 = vpow.pop %v1378
  %v1380 = vmul.f32 %v1276, 1.442695
  %v1381 = vpow.pop %v1380
  %v1382 = vmul.f32 %v1277, 1.442695
  %v1383 = vpow.pop %v1382
  %v1384 = vmul.f32 %v1278, 1.442695
  %v1385 = vpow.pop %v1384
  %v1386 = vmul.f32 %v1279, 1.442695
  %v1387 = vpow.pop %v1386
  %v1388 = vmul.f32 %v1280, 1.442695
  %v1389 = vpow.pop %v1388
  %v1390 = vmul.f32 %v1281, 1.442695
  %v1391 = vpow.pop %v1390
  %v1392 = vmul.f32 %v1282, 1.442695
  %v1393 = vpow.pop %v1392
  %v1394 = vmul.f32 %v1283, 1.442695
  %v1395 = vpow.pop %v1394
  %v1396 = vmul.f32 %v1284, 1.442695
  %v1397 = vpow.pop %v1396
  %v1398 = vmul.f32 %v1285, 1.442695
  %v1399 = vpow.pop %v1398
  %v1400 = vmul.f32 %v1286, 1.442695
  %v1401 = vpow.pop %v1400
  %v1402 = vmul.f32 %v1287, 1.442695
  %v1403 = vpow.pop %v1402
  %v1404 = vmul.f32 %v1288, 1.442695
  %v1405 = vpow.pop %v1404
  %v1406 = vmul.f32 %v1289, 1.442695
  %v1407 = vpow.pop %v1406
  %v1408 = vmul.f32 %v1290, 1.442695
  %v1409 = vpow.pop %v1408
  %v1410 = vmul.f32 %v1291, 1.442695
  %v1411 = vpow.pop %v1410
  %v1412 = vmul.f32 %v1292, 1.442695
  %v1413 = vpow.pop %v1412
  %v1414 = vmul.f32 %v1293, 1.442695
  %v1415 = vpow.pop %v1414
  %v1416 = vmul.f32 %v1294, 1.442695
  %v1417 = vpow.pop %v1416
  %v1418 = vmul.f32 %v1295, 1.442695
  %v1419 = vpow.pop %v1418
  %v1420 = vmul.f32 %v1296, 1.442695
  %v1421 = vpow.pop %v1420
  %v1422 = vmul.f32 %v1297, 1.442695
  %v1423 = vpow.pop %v1422
  %v1424 = vmul.f32 %v1298, 1.442695
  %v1425 = vpow.pop %v1424
  %v1426 = vmul.f32 %v1299, 1.442695
  %v1427 = vpow.pop %v1426
  %v1428 = vadd.f32 %v1301, %v1305
  %v1429 = vadd.f32 %v1428, %v1309
  %v1430 = vadd.f32 %v1429, %v1313
  %v1431 = vadd.f32 %v1430, %v1317
  %v1432 = vadd.f32 %v1431, %v1321
  %v1433 = vadd.f32 %v1432, %v1325
  %v1434 = vadd.f32 %v1433, %v1329
  %v1435 = vadd.f32 %v1434, %v1333
  %v1436 = vadd.f32 %v1435, %v1337
  %v1437 = vadd.f32 %v1436, %v1341
  %v1438 = vadd.f32 %v1437, %v1345
  %v1439 = vadd.f32 %v1438, %v1349
  %v1440 = vadd.f32 %v1439, %v1353
  %v1441 = vadd.f32 %v1440, %v1357
  %v1442 = vadd.f32 %v1441, %v1361
  %v1443 = vadd.f32 %v1442, %v1365
  %v1444 = vadd.f32 %v1443, %v1369
  %v1445 = vadd.f32 %v1444, %v1373
  %v1446 = vadd.f32 %v1445, %v1377
  %v1447 = vadd.f32 %v1446, %v1381
  %v1448 = vadd.f32 %v1447, %v1385
  %v1449 = vadd.f32 %v1448, %v1389
  %v1450 = vadd.f32 %v1449, %v1393
  %v1451 = vadd.f32 %v1450, %v1397
  %v1452 = vadd.f32 %v1451, %v1401
  %v1453 = vadd.f32 %v1452, %v1405
  %v1454 = vadd.f32 %v1453, %v1409
  %v1455 = vadd.f32 %v1454, %v1413
  %v1456 = vadd.f32 %v1455, %v1417
  %v1457 = vadd.f32 %v1456, %v1421
  %v1458 = vadd.f32 %v1457, %v1425
  %v1459 = vrot.slane %v1458, 4
  %v1460 = vadd.f32 %v1458, %v1459
  %v1461 = vrot.slane %v1460, 2
  %v1462 = vadd.f32 %v1460, %v1461
  %v1463 = vrot.slane %v1462, 1
  %v1464 = vadd.f32 %v1462, %v1463
  %v1465 = vadd.f32 %v1303, %v1307
  %v1466 = vadd.f32 %v1465, %v1311
  %v1467 = vadd.f32 %v1466, %v1315
  %v1468 = vadd.f32 %v1467, %v1319
  %v1469 = vadd.f32 %v1468, %v1323
  %v1470 = vadd.f32 %v1469, %v1327
  %v1471 = vadd.f32 %v1470, %v1331
  %v1472 = vadd.f32 %v1471, %v1335
  %v1473 = vadd.f32 %v1472, %v1339
  %v1474 = vadd.f32 %v1473, %v1343
  %v1475 = vadd.f32 %v1474, %v1347
  %v1476 = vadd.f32 %v1475, %v1351
  %v1477 = vadd.f32 %v1476, %v1355
  %v1478 = vadd.f32 %v1477, %v1359
  %v1479 = vadd.f32 %v1478, %v1363
  %v1480 = vadd.f32 %v1479, %v1367
  %v1481 = vadd.f32 %v1480, %v1371
  %v1482 = vadd.f32 %v1481, %v1375
  %v1483 = vadd.f32 %v1482, %v1379
  %v1484 = vadd.f32 %v1483, %v1383
  %v1485 = vadd.f32 %v1484, %v1387
  %v1486 = vadd.f32 %v1485, %v1391
  %v1487 = vadd.f32 %v1486, %v1395
  %v1488 = vadd.f32 %v1487, %v1399
  %v1489 = vadd.f32 %v1488, %v1403
  %v1490 = vadd.f32 %v1489, %v1407
  %v1491 = vadd.f32 %v1490, %v1411
  %v1492 = vadd.f32 %v1491, %v1415
  %v1493 = vadd.f32 %v1492, %v1419
  %v1494 = vadd.f32 %v1493, %v1423
  %v1495 = vadd.f32 %v1494, %v1427
  %v1496 = vrot.slane %v1495, 4
  %v1497 = vadd.f32 %v1495, %v1496
  %v1498 = vrot.slane %v1497, 2
  %v1499 = vadd.f32 %v1497, %v1498
  %v1500 = vrot.slane %v1499, 1
  %v1501 = vadd.f32 %v1499, %v1500
  %v1502 = vpack.c.bf16 %v872, %v872
  %v1503 = vpack.c.bf16 %v904, %v904
  %v1504 = vpack.c.bf16 %v1305, %v1301
  %v1505 = vpack.c.bf16 %v1307, %v1303
  %v1506 = vpack.c.bf16 %v1313, %v1309
  %v1507 = vpack.c.bf16 %v1315, %v1311
  %v1508 = vpack.c.bf16 %v1321, %v1317
  %v1509 = vpack.c.bf16 %v1323, %v1319
  %v1510 = vpack.c.bf16 %v1329, %v1325
  %v1511 = vpack.c.bf16 %v1331, %v1327
  %v1512 = vpack.c.bf16 %v1337, %v1333
  %v1513 = vpack.c.bf16 %v1339, %v1335
  %v1514 = vpack.c.bf16 %v1345, %v1341
  %v1515 = vpack.c.bf16 %v1347, %v1343
  %v1516 = vpack.c.bf16 %v1353, %v1349
  %v1517 = vpack.c.bf16 %v1355, %v1351
  %v1518 = vpack.c.bf16 %v1361, %v1357
  %v1519 = vpack.c.bf16 %v1363, %v1359
  %v1520 = vpack.c.bf16 %v1369, %v1365
  %v1521 = vpack.c.bf16 %v1371, %v1367
  %v1522 = vpack.c.bf16 %v1377, %v1373
  %v1523 = vpack.c.bf16 %v1379, %v1375
  %v1524 = vpack.c.bf16 %v1385, %v1381
  %v1525 = vpack.c.bf16 %v1387, %v1383
  %v1526 = vpack.c.bf16 %v1393, %v1389
  %v1527 = vpack.c.bf16 %v1395, %v1391
  %v1528 = vpack.c.bf16 %v1401, %v1397
  %v1529 = vpack.c.bf16 %v1403, %v1399
  %v1530 = vpack.c.bf16 %v1409, %v1405
  %v1531 = vpack.c.bf16 %v1411, %v1407
  %v1532 = vpack.c.bf16 %v1417, %v1413
  %v1533 = vpack.c.bf16 %v1419, %v1415
  %v1534 = vpack.c.bf16 %v1425, %v1421
  %v1535 = vpack.c.bf16 %v1427, %v1423
  %1536 = vmatpush.bf16.msra.mxu0 %v1518
  %1537 = vmatpush.bf16.msra.mxu0 %v1516
  %1538 = vmatpush.bf16.msra.mxu0 %v1514
  %1539 = vmatpush.bf16.msra.mxu0 %v1512
  %1540 = vmatpush.bf16.msra.mxu0 %v1510
  %1541 = vmatpush.bf16.msra.mxu0 %v1508
  %1542 = vmatpush.bf16.msra.mxu0 %v1506
  %1543 = vmatpush.bf16.msra.mxu0 %v1504
  %1544 = vmatmul.bf16.gmra.mxu0 %v1502
  %v1545 = vpop.f32.mrf.mxu0
  %v1546 = vadd.f32 0.0, %v1545
  %v1547 = vpop.f32.mrf.mxu0
  %1548 = vdwg.mxu0
  %1549 = vmatpush.bf16.msra.mxu0 %v1534
  %1550 = vmatpush.bf16.msra.mxu0 %v1532
  %1551 = vmatpush.bf16.msra.mxu0 %v1530
  %1552 = vmatpush.bf16.msra.mxu0 %v1528
  %1553 = vmatpush.bf16.msra.mxu0 %v1526
  %1554 = vmatpush.bf16.msra.mxu0 %v1524
  %1555 = vmatpush.bf16.msra.mxu0 %v1522
  %1556 = vmatpush.bf16.msra.mxu0 %v1520
  %1557 = vmatmul.bf16.gmra.mxu0 %v1503
  %v1558 = vpop.f32.mrf.mxu0
  %v1559 = vadd.f32 %v1546, %v1558
  %v1560 = vpop.f32.mrf.mxu0
  %1561 = vdwg.mxu0
  %1562 = vmatpush.bf16.msra.mxu0 %v1519
  %1563 = vmatpush.bf16.msra.mxu0 %v1517
  %1564 = vmatpush.bf16.msra.mxu0 %v1515
  %1565 = vmatpush.bf16.msra.mxu0 %v1513
  %1566 = vmatpush.bf16.msra.mxu0 %v1511
  %1567 = vmatpush.bf16.msra.mxu0 %v1509
  %1568 = vmatpush.bf16.msra.mxu0 %v1507
  %1569 = vmatpush.bf16.msra.mxu0 %v1505
  %1570 = vmatmul.bf16.gmra.mxu0 %v1502
  %v1571 = vpop.f32.mrf.mxu0
  %v1572 = vadd.f32 0.0, %v1571
  %v1573 = vpop.f32.mrf.mxu0
  %1574 = vdwg.mxu0
  %1575 = vmatpush.bf16.msra.mxu0 %v1535
  %1576 = vmatpush.bf16.msra.mxu0 %v1533
  %1577 = vmatpush.bf16.msra.mxu0 %v1531
  %1578 = vmatpush.bf16.msra.mxu0 %v1529
  %1579 = vmatpush.bf16.msra.mxu0 %v1527
  %1580 = vmatpush.bf16.msra.mxu0 %v1525
  %1581 = vmatpush.bf16.msra.mxu0 %v1523
  %1582 = vmatpush.bf16.msra.mxu0 %v1521
  %1583 = vmatmul.bf16.gmra.mxu0 %v1503
  %v1584 = vpop.f32.mrf.mxu0
  %v1585 = vadd.f32 %v1572, %v1584
  %v1586 = vpop.f32.mrf.mxu0
  %1587 = vdwg.mxu0
  %v1588 = vrcp.pop %v1464
  %v1589 = vrcp.pop %v1501
  %v1590 = vmul.f32 %v1559, %v1588
  %v1591 = vmul.f32 %v1585, %v1589
  %s1592 = scalar_lea.vmem %s4, 16
  %1593 = vst [vmem:[%s1592] sm:$0xff] %v1590
  %1594 = vst [vmem:[%s1592 + $0x8] sm:$0xff] %v1591
  // Predicated region
  $region18: #{mhsa_forward.1} parent=0 // pred_check
    _
  $region19: #{mhsa_forward.1} parent=0 // pred_check_branch
    %1596 = sbr.rel (0) target = $region21
  $region20: #{mhsa_forward.1} parent=0 // pred_region
    _
  $region21: #{mhsa_forward.1} parent=0 // pred_fallthru
    _
  // Predicated region
  $region22: #{mhsa_forward.1} parent=0 // pred_check
    _
  $region23: #{mhsa_forward.1} parent=0 // pred_check_branch
    %1598 = sbr.rel (0) target = $region25
  $region24: #{mhsa_forward.1} parent=0 // pred_region
    _
  $region25: #{mhsa_forward.1} parent=0 // pred_fallthru
    _

</llo_original>
